<compile_context>
chip_gen: v7x
topology: tpu7x:2x2x1
jax: 0.10.0
libtpu: 0.0.40
codegen_flags: <defaults>
</compile_context>

<pallas_src>
import functools

import numpy as np
import jax
import jax.numpy as jnp
from jax.experimental import pallas as pl
from jax.experimental.pallas import tpu as pltpu


# --------------------------------------------------------------------------
# Host-side glue: single-qubit gates & circuit-unitary construction
# (PennyLane conventions: wire 0 is the most-significant statevector bit).
# --------------------------------------------------------------------------
def _rx(theta):
    c = jnp.cos(theta / 2).astype(jnp.complex64)
    s = jnp.sin(theta / 2).astype(jnp.complex64)
    return jnp.stack([jnp.stack([c, -1j * s]), jnp.stack([-1j * s, c])])


def _ry(theta):
    c = jnp.cos(theta / 2).astype(jnp.complex64)
    s = jnp.sin(theta / 2).astype(jnp.complex64)
    return jnp.stack([jnp.stack([c, -s]), jnp.stack([s, c])])


def _rz(theta):
    c = jnp.cos(theta / 2)
    s = jnp.sin(theta / 2)
    p = (c - 1j * s).astype(jnp.complex64)
    m = (c + 1j * s).astype(jnp.complex64)
    zero = jnp.zeros((), jnp.complex64)
    return jnp.stack([jnp.stack([p, zero]), jnp.stack([zero, m])])


def _rot(phi, theta, omega):
    # qml.Rot(phi, theta, omega) = RZ(omega) RY(theta) RZ(phi)
    return _rz(omega) @ _ry(theta) @ _rz(phi)


def _cnot_matrix(n, c, t):
    """CNOT permutation matrix on n qubits, control c, target t (numpy const)."""
    D = 2 ** n
    M = np.zeros((D, D), dtype=np.complex64)
    for k in range(D):
        bits = [(k >> (n - 1 - w)) & 1 for w in range(n)]
        if bits[c] == 1:
            bits[t] ^= 1
        j = 0
        for w in range(n):
            j = (j << 1) | bits[w]
        M[j, k] = 1.0
    return M


def _sel_ranges(num_layers, n, shall_data_reupload):
    # PennyLane StronglyEntanglingLayers default ranges.  Each reupload step is
    # a single-layer SEL call -> range 1.  Guard n==1 (no entanglers).
    if n <= 1:
        return [0] * num_layers
    if shall_data_reupload:
        return [1] * num_layers
    return [1 + (l % (n - 1)) for l in range(num_layers)]


def _sel_layer_unitary(wl, r, n):
    # One SEL layer: Rot on every wire, then CNOT ring with range r.
    U = jnp.ones((1, 1), jnp.complex64)
    for w in range(n):
        U = jnp.kron(U, _rot(wl[w, 0], wl[w, 1], wl[w, 2]))
    if n > 1:
        for w in range(n):
            U = jnp.asarray(_cnot_matrix(n, w, (w + r) % n)) @ U
    return U


def _complex_to_block(u):
    # complex (D, D) -> real (2D, 2D) block matrix acting on [Re(psi); Im(psi)].
    ur = jnp.real(u).astype(jnp.float32)
    ui = jnp.imag(u).astype(jnp.float32)
    top = jnp.concatenate([ur, -ui], axis=1)
    bot = jnp.concatenate([ui, ur], axis=1)
    return jnp.concatenate([top, bot], axis=0)


def build_layer_blocks(weights, num_qubits, shall_data_reupload):
    num_layers = weights.shape[0]
    ranges = _sel_ranges(num_layers, num_qubits, shall_data_reupload)
    us = [_sel_layer_unitary(weights[l], ranges[l], num_qubits)
          for l in range(num_layers)]
    if shall_data_reupload:
        return jnp.stack([_complex_to_block(u) for u in us])   # (L, 2D, 2D)
    # no reupload -> fold all layers into one unitary (layer 0 applied first)
    u_tot = us[0]
    for u in us[1:]:
        u_tot = u @ u_tot
    return _complex_to_block(u_tot)[None]                      # (1, 2D, 2D)


# --------------------------------------------------------------------------
# Pallas kernel: statevector evolution + <Z_0> + affine head for one batch tile.
# --------------------------------------------------------------------------
def _bvqc_kernel(bs_ref, cs_ref, w_ref, out_ref, *, num_qubits):
    n = num_qubits
    D = 1 << n
    h = D // 2
    bt = out_ref.shape[1]
    l_eff = w_ref.shape[0]

    # Static basis-state bit patterns on the D state rows (wire 0 == MSB).
    ridx = jax.lax.broadcasted_iota(jnp.int32, (D, bt), 0)

    def wire_bit(w):
        return (ridx >> (n - 1 - w)) & 1

    # cos(x_w/2) / sin(x_w/2) rows, batch on lanes -> (1, bt), broadcast in the
    # arithmetic.  (Per review, a stride-0 pl.ds load could do the sublane
    # replication in the vld slot instead; kept as plain slices for simplicity
    # since each row is only consumed once or twice per layer.)
    def cw(w):
        return cs_ref[w:w + 1, :]

    def sw(w):
        return cs_ref[n + w:n + w + 1, :]

    def embed_zero():
        # Closed form for E(x)|0..0>: amp_k = (-i)^popcount(k) * prod_w (c|s).
        # Pure VPU work: n select+multiply stages, no matmul on the critical path.
        b = wire_bit(0)
        mag = jnp.where(b == 0, cw(0), sw(0))
        pc = b
        for w in range(1, n):
            b = wire_bit(w)
            mag = mag * jnp.where(b == 0, cw(w), sw(w))
            pc = pc + b
        pm = pc & 3          # popcount mod 4 -> phase (-i)^popcount
        re = jnp.where(pm == 0, mag, jnp.where(pm == 2, -mag, 0.0))
        im = jnp.where(pm == 3, mag, jnp.where(pm == 1, -mag, 0.0))
        return re, im

    def apply_rx_gates(re, im):
        # AngleEmbedding on a general state (re-upload path), wire by wire on
        # the VPU/XLU:  psi' = c*psi - i*s*(X_w psi);  X_w is the XOR-stride
        # row permutation r -> r ^ stride, built from two static rolls + select
        # (no MXU push/pop on this strictly serial chain).
        for w in range(n):
            stride = 1 << (n - 1 - w)
            bit0 = wire_bit(w) == 0
            c = cw(w)
            s = sw(w)
            re_x = jnp.where(bit0, jnp.roll(re, -stride, axis=0),
                             jnp.roll(re, stride, axis=0))
            im_x = jnp.where(bit0, jnp.roll(im, -stride, axis=0),
                             jnp.roll(im, stride, axis=0))
            re, im = c * re + s * im_x, c * im - s * re_x
        return re, im

    re = im = None
    # l_eff is tiny (1 for no-reupload since layers are host-folded, else L).
    for l in range(l_eff):
        if l == 0:
            re, im = embed_zero()                 # embedding of |0..0>
        else:
            re, im = apply_rx_gates(re, im)       # re-upload embedding
        psi = jnp.concatenate([re, im], axis=0)   # (2D, bt), aligned concat
        # one fused real (2D, 2D) block matmul == complex U_l @ psi
        psi = jnp.dot(w_ref[l], psi, preferred_element_type=jnp.float32)
        re, im = psi[:D, :], psi[D:, :]

    # <Z_0> (wire 0 == MSB): +1 on the first D/2 basis rows, -1 on the rest.
    top = re[:h, :] * re[:h, :] + im[:h, :] * im[:h, :]
    bot = re[h:, :] * re[h:, :] + im[h:, :] * im[h:, :]
    expv = jnp.sum(top - bot, axis=0, keepdims=True)          # (1, bt)
    out_ref[...] = (expv + bs_ref[0]) * bs_ref[1]


def _ceil_to(a, m):
    return ((a + m - 1) // m) * m


@functools.partial(jax.jit, static_argnames=("shall_data_reupload",))
def bvqc_forward(x, weights, bias, scale, *, shall_data_reupload):
    B, n = x.shape
    D = 2 ** n

    w_blocks = build_layer_blocks(weights, n, shall_data_reupload)  # (L_eff,2D,2D)
    l_eff = w_blocks.shape[0]

    # pack cos/sin into ONE (2n, B) array -> a single input DMA per grid step
    half = 0.5 * x.astype(jnp.float32)
    cs = jnp.concatenate([jnp.cos(half).T, jnp.sin(half).T], axis=0)  # (2n, B)

    # Batch tiling: big lane-dense tiles (amortize ~0.35us/step overhead), but
    # keep >= 2 grid steps when possible so both v7x TensorCores get work
    # (costs at most one extra tiny step on single-TC v5e/v6e).
    bp = _ceil_to(B, 128)
    block_b = min(512, bp)
    if bp >= 256:
        block_b = min(block_b, _ceil_to((bp + 1) // 2, 128))
    bp = _ceil_to(bp, block_b)
    if bp != B:
        # padded columns: cos=sin=0 -> psi=0 -> out=bias*scale; sliced off below
        cs = jnp.pad(cs, ((0, 0), (0, bp - B)))

    bs = jnp.stack([jnp.asarray(bias, jnp.float32),
                    jnp.asarray(scale, jnp.float32)])

    # NOTE: w_blocks has a constant index_map so it stays VMEM-resident across
    # steps (only ~L*4*D^2*4 bytes at n=4; double-buffer cost is negligible, so
    # no pipeline_mode override is needed at this size).
    out = pl.pallas_call(
        functools.partial(_bvqc_kernel, num_qubits=n),
        out_shape=jax.ShapeDtypeStruct((1, bp), jnp.float32),
        grid=(bp // block_b,),
        in_specs=[
            pl.BlockSpec(memory_space=pltpu.MemorySpace.SMEM),           # bias, scale
            pl.BlockSpec((2 * n, block_b), lambda i: (0, i)),            # packed cos/sin
            pl.BlockSpec((l_eff, 2 * D, 2 * D), lambda i: (0, 0, 0)),    # layer block mats
        ],
        out_specs=pl.BlockSpec((1, block_b), lambda i: (0, i)),          # lane-dense row
        compiler_params=pltpu.CompilerParams(
            dimension_semantics=("parallel",)),
    )(bs, cs, w_blocks)
    return out[0, :B]


# --------------------------------------------------------------------------
# Plain-JAX reference (same math, no Pallas) for a sanity check.
# --------------------------------------------------------------------------
def _embedding_unitary(x_row, n):
    U = jnp.ones((1, 1), jnp.complex64)
    for w in range(n):
        U = jnp.kron(U, _rx(x_row[w]))
    return U


def bvqc_reference(x, weights, bias, scale, *, shall_data_reupload):
    B, n = x.shape
    D = 2 ** n
    L = weights.shape[0]
    E = jax.vmap(lambda xr: _embedding_unitary(xr, n))(x)            # (B, D, D)
    ranges = _sel_ranges(L, n, shall_data_reupload)
    W = [_sel_layer_unitary(weights[l], ranges[l], n) for l in range(L)]
    psi = jnp.zeros((B, D), jnp.complex64).at[:, 0].set(1.0)
    if shall_data_reupload:
        for l in range(L):
            psi = jnp.einsum("bij,bj->bi", E, psi)
            psi = jnp.einsum("ij,bj->bi", W[l], psi)
    else:
        psi = jnp.einsum("bij,bj->bi", E, psi)
        for l in range(L):
            psi = jnp.einsum("ij,bj->bi", W[l], psi)
    z = jnp.where(jnp.arange(D) < D // 2, 1.0, -1.0)
    ev = jnp.sum((jnp.abs(psi) ** 2) * z, axis=1)
    return (ev + bias) * scale


if __name__ == "__main__":
    NUM_QUBITS = 4
    NUM_LAYERS = 2
    UNIFORM_RANGE = 1.0
    CLASSES = [0, 1]          # unused by BVQC.forward (single-expval head)
    BATCH = 1024              # -> 2 batch tiles of 512 lanes (exercises the grid)

    key = jax.random.PRNGKey(0)
    kw, kx = jax.random.split(key)
    # weights ~ Uniform(-uniform_range, uniform_range), shape (L, n_qubits, 3)
    weights = jax.random.uniform(kw, (NUM_LAYERS, NUM_QUBITS, 3),
                                 minval=-UNIFORM_RANGE, maxval=UNIFORM_RANGE,
                                 dtype=jnp.float32)
    x = jax.random.uniform(kx, (BATCH, NUM_QUBITS),
                           minval=0.0, maxval=float(np.pi), dtype=jnp.float32)
    bias = jnp.float32(0.0)    # BVQC.__init__: nn.Parameter(torch.tensor(0.0))
    scale = jnp.float32(1.0)   # BVQC.__init__: nn.Parameter(torch.tensor(1.0))

    for reupload in (True, False):
        out = bvqc_forward(x, weights, bias, scale,
                           shall_data_reupload=reupload)
        out = jax.block_until_ready(out)
        ref = bvqc_reference(x, weights, bias, scale,
                             shall_data_reupload=reupload)
        assert out.shape == (BATCH,)
        assert np.allclose(np.asarray(out), np.asarray(ref), atol=1e-4), (
            reupload, np.max(np.abs(np.asarray(out) - np.asarray(ref))))

    print("KERNEL_OK")
</pallas_src>

<mosaic_0001>
module attributes {stable_mosaic.version = 11 : i64} {
  func.func @_bvqc_kernel(%arg0: i32, %arg1: memref<2xf32, #tpu.memory_space<smem>>, %arg2: memref<8x512xf32, #tpu.memory_space<vmem>>, %arg3: memref<2x32x32xf32, #tpu.memory_space<vmem>>, %arg4: memref<1x512xf32, #tpu.memory_space<vmem>>) attributes {dimension_semantics = [#tpu.dimension_semantics<parallel>], iteration_bounds = array<i64: 2>, scalar_prefetch = 0 : i64, scratch_operands = 0 : i64, tpu.core_type = #tpu.core_type<tc>, window_params = [{transform_indices = @transform_0, window_bounds = array<i64: 2>}, {transform_indices = @transform_1, window_bounds = array<i64: 8, 512>}, {pipeline_mode = #tpu.pipeline_mode<synchronous>, transform_indices = @transform_2, window_bounds = array<i64: 2, 32, 32>}, {transform_indices = @transform_3, window_bounds = array<i64: 1, 512>}]} {
    %0 = tpu.iota {dimensions = array<i32: 0>} : vector<16x512xi32>
    %c3_i32 = arith.constant 3 : i32
    %1 = vector.broadcast %c3_i32 : i32 to vector<16x512xi32>
    %2 = arith.shrsi %0, %1 : vector<16x512xi32>
    %c1_i32 = arith.constant 1 : i32
    %3 = vector.broadcast %c1_i32 : i32 to vector<16x512xi32>
    %4 = arith.andi %2, %3 : vector<16x512xi32>
    %c0_i32 = arith.constant 0 : i32
    %5 = vector.broadcast %c0_i32 : i32 to vector<16x512xi32>
    %6 = arith.cmpi eq, %4, %5 : vector<16x512xi32>
    %c0 = arith.constant 0 : index
    %c0_0 = arith.constant 0 : index
    %7 = vector.load %arg2[%c0, %c0_0] : memref<8x512xf32, #tpu.memory_space<vmem>>, vector<1x512xf32>
    %c4 = arith.constant 4 : index
    %c0_1 = arith.constant 0 : index
    %8 = vector.load %arg2[%c4, %c0_1] : memref<8x512xf32, #tpu.memory_space<vmem>>, vector<1x512xf32>
    %9 = vector.shape_cast %7 : vector<1x512xf32> to vector<1x512xf32>
    %10 = vector.broadcast %9 : vector<1x512xf32> to vector<16x512xf32>
    %11 = vector.shape_cast %8 : vector<1x512xf32> to vector<1x512xf32>
    %12 = vector.broadcast %11 : vector<1x512xf32> to vector<16x512xf32>
    %13 = arith.select %6, %10, %12 : vector<16x512xi1>, vector<16x512xf32>
    %c2_i32 = arith.constant 2 : i32
    %14 = vector.broadcast %c2_i32 : i32 to vector<16x512xi32>
    %15 = arith.shrsi %0, %14 : vector<16x512xi32>
    %c1_i32_2 = arith.constant 1 : i32
    %16 = vector.broadcast %c1_i32_2 : i32 to vector<16x512xi32>
    %17 = arith.andi %15, %16 : vector<16x512xi32>
    %c0_i32_3 = arith.constant 0 : i32
    %18 = vector.broadcast %c0_i32_3 : i32 to vector<16x512xi32>
    %19 = arith.cmpi eq, %17, %18 : vector<16x512xi32>
    %c1 = arith.constant 1 : index
    %c0_4 = arith.constant 0 : index
    %20 = vector.load %arg2[%c1, %c0_4] : memref<8x512xf32, #tpu.memory_space<vmem>>, vector<1x512xf32>
    %c5 = arith.constant 5 : index
    %c0_5 = arith.constant 0 : index
    %21 = vector.load %arg2[%c5, %c0_5] : memref<8x512xf32, #tpu.memory_space<vmem>>, vector<1x512xf32>
    %22 = vector.shape_cast %20 : vector<1x512xf32> to vector<1x512xf32>
    %23 = vector.broadcast %22 : vector<1x512xf32> to vector<16x512xf32>
    %24 = vector.shape_cast %21 : vector<1x512xf32> to vector<1x512xf32>
    %25 = vector.broadcast %24 : vector<1x512xf32> to vector<16x512xf32>
    %26 = arith.select %19, %23, %25 : vector<16x512xi1>, vector<16x512xf32>
    %27 = arith.mulf %13, %26 : vector<16x512xf32>
    %28 = arith.addi %4, %17 : vector<16x512xi32>
    %c1_i32_6 = arith.constant 1 : i32
    %29 = vector.broadcast %c1_i32_6 : i32 to vector<16x512xi32>
    %30 = arith.shrsi %0, %29 : vector<16x512xi32>
    %c1_i32_7 = arith.constant 1 : i32
    %31 = vector.broadcast %c1_i32_7 : i32 to vector<16x512xi32>
    %32 = arith.andi %30, %31 : vector<16x512xi32>
    %c0_i32_8 = arith.constant 0 : i32
    %33 = vector.broadcast %c0_i32_8 : i32 to vector<16x512xi32>
    %34 = arith.cmpi eq, %32, %33 : vector<16x512xi32>
    %c2 = arith.constant 2 : index
    %c0_9 = arith.constant 0 : index
    %35 = vector.load %arg2[%c2, %c0_9] : memref<8x512xf32, #tpu.memory_space<vmem>>, vector<1x512xf32>
    %c6 = arith.constant 6 : index
    %c0_10 = arith.constant 0 : index
    %36 = vector.load %arg2[%c6, %c0_10] : memref<8x512xf32, #tpu.memory_space<vmem>>, vector<1x512xf32>
    %37 = vector.shape_cast %35 : vector<1x512xf32> to vector<1x512xf32>
    %38 = vector.broadcast %37 : vector<1x512xf32> to vector<16x512xf32>
    %39 = vector.shape_cast %36 : vector<1x512xf32> to vector<1x512xf32>
    %40 = vector.broadcast %39 : vector<1x512xf32> to vector<16x512xf32>
    %41 = arith.select %34, %38, %40 : vector<16x512xi1>, vector<16x512xf32>
    %42 = arith.mulf %27, %41 : vector<16x512xf32>
    %43 = arith.addi %28, %32 : vector<16x512xi32>
    %c0_i32_11 = arith.constant 0 : i32
    %44 = vector.broadcast %c0_i32_11 : i32 to vector<16x512xi32>
    %45 = arith.shrsi %0, %44 : vector<16x512xi32>
    %c1_i32_12 = arith.constant 1 : i32
    %46 = vector.broadcast %c1_i32_12 : i32 to vector<16x512xi32>
    %47 = arith.andi %45, %46 : vector<16x512xi32>
    %c0_i32_13 = arith.constant 0 : i32
    %48 = vector.broadcast %c0_i32_13 : i32 to vector<16x512xi32>
    %49 = arith.cmpi eq, %47, %48 : vector<16x512xi32>
    %c3 = arith.constant 3 : index
    %c0_14 = arith.constant 0 : index
    %50 = vector.load %arg2[%c3, %c0_14] : memref<8x512xf32, #tpu.memory_space<vmem>>, vector<1x512xf32>
    %c7 = arith.constant 7 : index
    %c0_15 = arith.constant 0 : index
    %51 = vector.load %arg2[%c7, %c0_15] : memref<8x512xf32, #tpu.memory_space<vmem>>, vector<1x512xf32>
    %52 = vector.shape_cast %50 : vector<1x512xf32> to vector<1x512xf32>
    %53 = vector.broadcast %52 : vector<1x512xf32> to vector<16x512xf32>
    %54 = vector.shape_cast %51 : vector<1x512xf32> to vector<1x512xf32>
    %55 = vector.broadcast %54 : vector<1x512xf32> to vector<16x512xf32>
    %56 = arith.select %49, %53, %55 : vector<16x512xi1>, vector<16x512xf32>
    %57 = arith.mulf %42, %56 : vector<16x512xf32>
    %58 = arith.addi %43, %47 : vector<16x512xi32>
    %c3_i32_16 = arith.constant 3 : i32
    %59 = vector.broadcast %c3_i32_16 : i32 to vector<16x512xi32>
    %60 = arith.andi %58, %59 : vector<16x512xi32>
    %c0_i32_17 = arith.constant 0 : i32
    %61 = vector.broadcast %c0_i32_17 : i32 to vector<16x512xi32>
    %62 = arith.cmpi eq, %60, %61 : vector<16x512xi32>
    %c2_i32_18 = arith.constant 2 : i32
    %63 = vector.broadcast %c2_i32_18 : i32 to vector<16x512xi32>
    %64 = arith.cmpi eq, %60, %63 : vector<16x512xi32>
    %cst = arith.constant 0.000000e+00 : f32
    %65 = vector.broadcast %cst : f32 to vector<16x512xf32>
    %66 = arith.subf %65, %57 : vector<16x512xf32>
    %cst_19 = arith.constant 0.000000e+00 : f32
    %67 = vector.broadcast %cst_19 : f32 to vector<16x512xf32>
    %68 = arith.select %64, %66, %67 : vector<16x512xi1>, vector<16x512xf32>
    %69 = arith.select %62, %57, %68 : vector<16x512xi1>, vector<16x512xf32>
    %c3_i32_20 = arith.constant 3 : i32
    %70 = vector.broadcast %c3_i32_20 : i32 to vector<16x512xi32>
    %71 = arith.cmpi eq, %60, %70 : vector<16x512xi32>
    %c1_i32_21 = arith.constant 1 : i32
    %72 = vector.broadcast %c1_i32_21 : i32 to vector<16x512xi32>
    %73 = arith.cmpi eq, %60, %72 : vector<16x512xi32>
    %cst_22 = arith.constant 0.000000e+00 : f32
    %74 = vector.broadcast %cst_22 : f32 to vector<16x512xf32>
    %75 = arith.subf %74, %57 : vector<16x512xf32>
    %cst_23 = arith.constant 0.000000e+00 : f32
    %76 = vector.broadcast %cst_23 : f32 to vector<16x512xf32>
    %77 = arith.select %73, %75, %76 : vector<16x512xi1>, vector<16x512xf32>
    %78 = arith.select %71, %57, %77 : vector<16x512xi1>, vector<16x512xf32>
    %79 = tpu.concatenate %69, %78 in 0 : vector<16x512xf32>, vector<16x512xf32> -> vector<32x512xf32>
    %c0_24 = arith.constant 0 : index
    %c0_25 = arith.constant 0 : index
    %c0_26 = arith.constant 0 : index
    %80 = vector.load %arg3[%c0_24, %c0_25, %c0_26] : memref<2x32x32xf32, #tpu.memory_space<vmem>>, vector<1x32x32xf32>
    %81 = vector.shape_cast %80 : vector<1x32x32xf32> to vector<32x32xf32>
    %cst_27 = arith.constant dense<0.000000e+00> : vector<32x512xf32>
    %82 = tpu.matmul %81, %79, %cst_27 {dimension_numbers = #tpu.dot_dimension_numbers<[1], [0], [0], [1], [0, 0, 1, 1], [], []>} : vector<32x32xf32>, vector<32x512xf32>, vector<32x512xf32> -> vector<32x512xf32>
    %83 = vector.extract_strided_slice %82 {offsets = [0, 0], sizes = [16, 512], strides = [1, 1]} : vector<32x512xf32> to vector<16x512xf32>
    %84 = vector.extract_strided_slice %82 {offsets = [16, 0], sizes = [16, 512], strides = [1, 1]} : vector<32x512xf32> to vector<16x512xf32>
    %c3_i32_28 = arith.constant 3 : i32
    %85 = vector.broadcast %c3_i32_28 : i32 to vector<16x512xi32>
    %86 = arith.shrsi %0, %85 : vector<16x512xi32>
    %c1_i32_29 = arith.constant 1 : i32
    %87 = vector.broadcast %c1_i32_29 : i32 to vector<16x512xi32>
    %88 = arith.andi %86, %87 : vector<16x512xi32>
    %c0_i32_30 = arith.constant 0 : i32
    %89 = vector.broadcast %c0_i32_30 : i32 to vector<16x512xi32>
    %90 = arith.cmpi eq, %88, %89 : vector<16x512xi32>
    %c0_31 = arith.constant 0 : index
    %c0_32 = arith.constant 0 : index
    %91 = vector.load %arg2[%c0_31, %c0_32] : memref<8x512xf32, #tpu.memory_space<vmem>>, vector<1x512xf32>
    %c4_33 = arith.constant 4 : index
    %c0_34 = arith.constant 0 : index
    %92 = vector.load %arg2[%c4_33, %c0_34] : memref<8x512xf32, #tpu.memory_space<vmem>>, vector<1x512xf32>
    %93 = vector.extract_strided_slice %83 {offsets = [8, 0], sizes = [8, 512], strides = [1, 1]} : vector<16x512xf32> to vector<8x512xf32>
    %94 = vector.extract_strided_slice %83 {offsets = [0, 0], sizes = [8, 512], strides = [1, 1]} : vector<16x512xf32> to vector<8x512xf32>
    %95 = tpu.concatenate %93, %94 in 0 : vector<8x512xf32>, vector<8x512xf32> -> vector<16x512xf32>
    %96 = vector.extract_strided_slice %83 {offsets = [8, 0], sizes = [8, 512], strides = [1, 1]} : vector<16x512xf32> to vector<8x512xf32>
    %97 = vector.extract_strided_slice %83 {offsets = [0, 0], sizes = [8, 512], strides = [1, 1]} : vector<16x512xf32> to vector<8x512xf32>
    %98 = tpu.concatenate %96, %97 in 0 : vector<8x512xf32>, vector<8x512xf32> -> vector<16x512xf32>
    %99 = arith.select %90, %95, %98 : vector<16x512xi1>, vector<16x512xf32>
    %100 = vector.extract_strided_slice %84 {offsets = [8, 0], sizes = [8, 512], strides = [1, 1]} : vector<16x512xf32> to vector<8x512xf32>
    %101 = vector.extract_strided_slice %84 {offsets = [0, 0], sizes = [8, 512], strides = [1, 1]} : vector<16x512xf32> to vector<8x512xf32>
    %102 = tpu.concatenate %100, %101 in 0 : vector<8x512xf32>, vector<8x512xf32> -> vector<16x512xf32>
    %103 = vector.extract_strided_slice %84 {offsets = [8, 0], sizes = [8, 512], strides = [1, 1]} : vector<16x512xf32> to vector<8x512xf32>
    %104 = vector.extract_strided_slice %84 {offsets = [0, 0], sizes = [8, 512], strides = [1, 1]} : vector<16x512xf32> to vector<8x512xf32>
    %105 = tpu.concatenate %103, %104 in 0 : vector<8x512xf32>, vector<8x512xf32> -> vector<16x512xf32>
    %106 = arith.select %90, %102, %105 : vector<16x512xi1>, vector<16x512xf32>
    %107 = vector.broadcast %91 : vector<1x512xf32> to vector<16x512xf32>
    %108 = arith.mulf %107, %83 : vector<16x512xf32>
    %109 = vector.broadcast %92 : vector<1x512xf32> to vector<16x512xf32>
    %110 = arith.mulf %109, %106 : vector<16x512xf32>
    %111 = arith.addf %108, %110 : vector<16x512xf32>
    %112 = vector.broadcast %91 : vector<1x512xf32> to vector<16x512xf32>
    %113 = arith.mulf %112, %84 : vector<16x512xf32>
    %114 = vector.broadcast %92 : vector<1x512xf32> to vector<16x512xf32>
    %115 = arith.mulf %114, %99 : vector<16x512xf32>
    %116 = arith.subf %113, %115 : vector<16x512xf32>
    %c2_i32_35 = arith.constant 2 : i32
    %117 = vector.broadcast %c2_i32_35 : i32 to vector<16x512xi32>
    %118 = arith.shrsi %0, %117 : vector<16x512xi32>
    %c1_i32_36 = arith.constant 1 : i32
    %119 = vector.broadcast %c1_i32_36 : i32 to vector<16x512xi32>
    %120 = arith.andi %118, %119 : vector<16x512xi32>
    %c0_i32_37 = arith.constant 0 : i32
    %121 = vector.broadcast %c0_i32_37 : i32 to vector<16x512xi32>
    %122 = arith.cmpi eq, %120, %121 : vector<16x512xi32>
    %c1_38 = arith.constant 1 : index
    %c0_39 = arith.constant 0 : index
    %123 = vector.load %arg2[%c1_38, %c0_39] : memref<8x512xf32, #tpu.memory_space<vmem>>, vector<1x512xf32>
    %c5_40 = arith.constant 5 : index
    %c0_41 = arith.constant 0 : index
    %124 = vector.load %arg2[%c5_40, %c0_41] : memref<8x512xf32, #tpu.memory_space<vmem>>, vector<1x512xf32>
    %125 = vector.extract_strided_slice %111 {offsets = [4, 0], sizes = [12, 512], strides = [1, 1]} : vector<16x512xf32> to vector<12x512xf32>
    %126 = vector.extract_strided_slice %111 {offsets = [0, 0], sizes = [4, 512], strides = [1, 1]} : vector<16x512xf32> to vector<4x512xf32>
    %127 = tpu.concatenate %125, %126 in 0 : vector<12x512xf32>, vector<4x512xf32> -> vector<16x512xf32>
    %128 = vector.extract_strided_slice %111 {offsets = [12, 0], sizes = [4, 512], strides = [1, 1]} : vector<16x512xf32> to vector<4x512xf32>
    %129 = vector.extract_strided_slice %111 {offsets = [0, 0], sizes = [12, 512], strides = [1, 1]} : vector<16x512xf32> to vector<12x512xf32>
    %130 = tpu.concatenate %128, %129 in 0 : vector<4x512xf32>, vector<12x512xf32> -> vector<16x512xf32>
    %131 = arith.select %122, %127, %130 : vector<16x512xi1>, vector<16x512xf32>
    %132 = vector.extract_strided_slice %116 {offsets = [4, 0], sizes = [12, 512], strides = [1, 1]} : vector<16x512xf32> to vector<12x512xf32>
    %133 = vector.extract_strided_slice %116 {offsets = [0, 0], sizes = [4, 512], strides = [1, 1]} : vector<16x512xf32> to vector<4x512xf32>
    %134 = tpu.concatenate %132, %133 in 0 : vector<12x512xf32>, vector<4x512xf32> -> vector<16x512xf32>
    %135 = vector.extract_strided_slice %116 {offsets = [12, 0], sizes = [4, 512], strides = [1, 1]} : vector<16x512xf32> to vector<4x512xf32>
    %136 = vector.extract_strided_slice %116 {offsets = [0, 0], sizes = [12, 512], strides = [1, 1]} : vector<16x512xf32> to vector<12x512xf32>
    %137 = tpu.concatenate %135, %136 in 0 : vector<4x512xf32>, vector<12x512xf32> -> vector<16x512xf32>
    %138 = arith.select %122, %134, %137 : vector<16x512xi1>, vector<16x512xf32>
    %139 = vector.broadcast %123 : vector<1x512xf32> to vector<16x512xf32>
    %140 = arith.mulf %139, %111 : vector<16x512xf32>
    %141 = vector.broadcast %124 : vector<1x512xf32> to vector<16x512xf32>
    %142 = arith.mulf %141, %138 : vector<16x512xf32>
    %143 = arith.addf %140, %142 : vector<16x512xf32>
    %144 = vector.broadcast %123 : vector<1x512xf32> to vector<16x512xf32>
    %145 = arith.mulf %144, %116 : vector<16x512xf32>
    %146 = vector.broadcast %124 : vector<1x512xf32> to vector<16x512xf32>
    %147 = arith.mulf %146, %131 : vector<16x512xf32>
    %148 = arith.subf %145, %147 : vector<16x512xf32>
    %c1_i32_42 = arith.constant 1 : i32
    %149 = vector.broadcast %c1_i32_42 : i32 to vector<16x512xi32>
    %150 = arith.shrsi %0, %149 : vector<16x512xi32>
    %c1_i32_43 = arith.constant 1 : i32
    %151 = vector.broadcast %c1_i32_43 : i32 to vector<16x512xi32>
    %152 = arith.andi %150, %151 : vector<16x512xi32>
    %c0_i32_44 = arith.constant 0 : i32
    %153 = vector.broadcast %c0_i32_44 : i32 to vector<16x512xi32>
    %154 = arith.cmpi eq, %152, %153 : vector<16x512xi32>
    %c2_45 = arith.constant 2 : index
    %c0_46 = arith.constant 0 : index
    %155 = vector.load %arg2[%c2_45, %c0_46] : memref<8x512xf32, #tpu.memory_space<vmem>>, vector<1x512xf32>
    %c6_47 = arith.constant 6 : index
    %c0_48 = arith.constant 0 : index
    %156 = vector.load %arg2[%c6_47, %c0_48] : memref<8x512xf32, #tpu.memory_space<vmem>>, vector<1x512xf32>
    %157 = vector.extract_strided_slice %143 {offsets = [2, 0], sizes = [14, 512], strides = [1, 1]} : vector<16x512xf32> to vector<14x512xf32>
    %158 = vector.extract_strided_slice %143 {offsets = [0, 0], sizes = [2, 512], strides = [1, 1]} : vector<16x512xf32> to vector<2x512xf32>
    %159 = tpu.concatenate %157, %158 in 0 : vector<14x512xf32>, vector<2x512xf32> -> vector<16x512xf32>
    %160 = vector.extract_strided_slice %143 {offsets = [14, 0], sizes = [2, 512], strides = [1, 1]} : vector<16x512xf32> to vector<2x512xf32>
    %161 = vector.extract_strided_slice %143 {offsets = [0, 0], sizes = [14, 512], strides = [1, 1]} : vector<16x512xf32> to vector<14x512xf32>
    %162 = tpu.concatenate %160, %161 in 0 : vector<2x512xf32>, vector<14x512xf32> -> vector<16x512xf32>
    %163 = arith.select %154, %159, %162 : vector<16x512xi1>, vector<16x512xf32>
    %164 = vector.extract_strided_slice %148 {offsets = [2, 0], sizes = [14, 512], strides = [1, 1]} : vector<16x512xf32> to vector<14x512xf32>
    %165 = vector.extract_strided_slice %148 {offsets = [0, 0], sizes = [2, 512], strides = [1, 1]} : vector<16x512xf32> to vector<2x512xf32>
    %166 = tpu.concatenate %164, %165 in 0 : vector<14x512xf32>, vector<2x512xf32> -> vector<16x512xf32>
    %167 = vector.extract_strided_slice %148 {offsets = [14, 0], sizes = [2, 512], strides = [1, 1]} : vector<16x512xf32> to vector<2x512xf32>
    %168 = vector.extract_strided_slice %148 {offsets = [0, 0], sizes = [14, 512], strides = [1, 1]} : vector<16x512xf32> to vector<14x512xf32>
    %169 = tpu.concatenate %167, %168 in 0 : vector<2x512xf32>, vector<14x512xf32> -> vector<16x512xf32>
    %170 = arith.select %154, %166, %169 : vector<16x512xi1>, vector<16x512xf32>
    %171 = vector.broadcast %155 : vector<1x512xf32> to vector<16x512xf32>
    %172 = arith.mulf %171, %143 : vector<16x512xf32>
    %173 = vector.broadcast %156 : vector<1x512xf32> to vector<16x512xf32>
    %174 = arith.mulf %173, %170 : vector<16x512xf32>
    %175 = arith.addf %172, %174 : vector<16x512xf32>
    %176 = vector.broadcast %155 : vector<1x512xf32> to vector<16x512xf32>
    %177 = arith.mulf %176, %148 : vector<16x512xf32>
    %178 = vector.broadcast %156 : vector<1x512xf32> to vector<16x512xf32>
    %179 = arith.mulf %178, %163 : vector<16x512xf32>
    %180 = arith.subf %177, %179 : vector<16x512xf32>
    %c0_i32_49 = arith.constant 0 : i32
    %181 = vector.broadcast %c0_i32_49 : i32 to vector<16x512xi32>
    %182 = arith.shrsi %0, %181 : vector<16x512xi32>
    %c1_i32_50 = arith.constant 1 : i32
    %183 = vector.broadcast %c1_i32_50 : i32 to vector<16x512xi32>
    %184 = arith.andi %182, %183 : vector<16x512xi32>
    %c0_i32_51 = arith.constant 0 : i32
    %185 = vector.broadcast %c0_i32_51 : i32 to vector<16x512xi32>
    %186 = arith.cmpi eq, %184, %185 : vector<16x512xi32>
    %c3_52 = arith.constant 3 : index
    %c0_53 = arith.constant 0 : index
    %187 = vector.load %arg2[%c3_52, %c0_53] : memref<8x512xf32, #tpu.memory_space<vmem>>, vector<1x512xf32>
    %c7_54 = arith.constant 7 : index
    %c0_55 = arith.constant 0 : index
    %188 = vector.load %arg2[%c7_54, %c0_55] : memref<8x512xf32, #tpu.memory_space<vmem>>, vector<1x512xf32>
    %189 = vector.extract_strided_slice %175 {offsets = [1, 0], sizes = [15, 512], strides = [1, 1]} : vector<16x512xf32> to vector<15x512xf32>
    %190 = vector.extract_strided_slice %175 {offsets = [0, 0], sizes = [1, 512], strides = [1, 1]} : vector<16x512xf32> to vector<1x512xf32>
    %191 = tpu.concatenate %189, %190 in 0 : vector<15x512xf32>, vector<1x512xf32> -> vector<16x512xf32>
    %192 = vector.extract_strided_slice %175 {offsets = [15, 0], sizes = [1, 512], strides = [1, 1]} : vector<16x512xf32> to vector<1x512xf32>
    %193 = vector.extract_strided_slice %175 {offsets = [0, 0], sizes = [15, 512], strides = [1, 1]} : vector<16x512xf32> to vector<15x512xf32>
    %194 = tpu.concatenate %192, %193 in 0 : vector<1x512xf32>, vector<15x512xf32> -> vector<16x512xf32>
    %195 = arith.select %186, %191, %194 : vector<16x512xi1>, vector<16x512xf32>
    %196 = vector.extract_strided_slice %180 {offsets = [1, 0], sizes = [15, 512], strides = [1, 1]} : vector<16x512xf32> to vector<15x512xf32>
    %197 = vector.extract_strided_slice %180 {offsets = [0, 0], sizes = [1, 512], strides = [1, 1]} : vector<16x512xf32> to vector<1x512xf32>
    %198 = tpu.concatenate %196, %197 in 0 : vector<15x512xf32>, vector<1x512xf32> -> vector<16x512xf32>
    %199 = vector.extract_strided_slice %180 {offsets = [15, 0], sizes = [1, 512], strides = [1, 1]} : vector<16x512xf32> to vector<1x512xf32>
    %200 = vector.extract_strided_slice %180 {offsets = [0, 0], sizes = [15, 512], strides = [1, 1]} : vector<16x512xf32> to vector<15x512xf32>
    %201 = tpu.concatenate %199, %200 in 0 : vector<1x512xf32>, vector<15x512xf32> -> vector<16x512xf32>
    %202 = arith.select %186, %198, %201 : vector<16x512xi1>, vector<16x512xf32>
    %203 = vector.broadcast %187 : vector<1x512xf32> to vector<16x512xf32>
    %204 = arith.mulf %203, %175 : vector<16x512xf32>
    %205 = vector.broadcast %188 : vector<1x512xf32> to vector<16x512xf32>
    %206 = arith.mulf %205, %202 : vector<16x512xf32>
    %207 = arith.addf %204, %206 : vector<16x512xf32>
    %208 = vector.broadcast %187 : vector<1x512xf32> to vector<16x512xf32>
    %209 = arith.mulf %208, %180 : vector<16x512xf32>
    %210 = vector.broadcast %188 : vector<1x512xf32> to vector<16x512xf32>
    %211 = arith.mulf %210, %195 : vector<16x512xf32>
    %212 = arith.subf %209, %211 : vector<16x512xf32>
    %213 = tpu.concatenate %207, %212 in 0 : vector<16x512xf32>, vector<16x512xf32> -> vector<32x512xf32>
    %c1_56 = arith.constant 1 : index
    %c0_57 = arith.constant 0 : index
    %c0_58 = arith.constant 0 : index
    %214 = vector.load %arg3[%c1_56, %c0_57, %c0_58] : memref<2x32x32xf32, #tpu.memory_space<vmem>>, vector<1x32x32xf32>
    %215 = vector.shape_cast %214 : vector<1x32x32xf32> to vector<32x32xf32>
    %cst_59 = arith.constant dense<0.000000e+00> : vector<32x512xf32>
    %216 = tpu.matmul %215, %213, %cst_59 {dimension_numbers = #tpu.dot_dimension_numbers<[1], [0], [0], [1], [0, 0, 1, 1], [], []>} : vector<32x32xf32>, vector<32x512xf32>, vector<32x512xf32> -> vector<32x512xf32>
    %217 = vector.extract_strided_slice %216 {offsets = [0, 0], sizes = [16, 512], strides = [1, 1]} : vector<32x512xf32> to vector<16x512xf32>
    %218 = vector.extract_strided_slice %216 {offsets = [16, 0], sizes = [16, 512], strides = [1, 1]} : vector<32x512xf32> to vector<16x512xf32>
    %219 = vector.extract_strided_slice %217 {offsets = [0, 0], sizes = [8, 512], strides = [1, 1]} : vector<16x512xf32> to vector<8x512xf32>
    %220 = vector.extract_strided_slice %217 {offsets = [0, 0], sizes = [8, 512], strides = [1, 1]} : vector<16x512xf32> to vector<8x512xf32>
    %221 = arith.mulf %219, %220 : vector<8x512xf32>
    %222 = vector.extract_strided_slice %218 {offsets = [0, 0], sizes = [8, 512], strides = [1, 1]} : vector<16x512xf32> to vector<8x512xf32>
    %223 = vector.extract_strided_slice %218 {offsets = [0, 0], sizes = [8, 512], strides = [1, 1]} : vector<16x512xf32> to vector<8x512xf32>
    %224 = arith.mulf %222, %223 : vector<8x512xf32>
    %225 = arith.addf %221, %224 : vector<8x512xf32>
    %226 = vector.extract_strided_slice %217 {offsets = [8, 0], sizes = [8, 512], strides = [1, 1]} : vector<16x512xf32> to vector<8x512xf32>
    %227 = vector.extract_strided_slice %217 {offsets = [8, 0], sizes = [8, 512], strides = [1, 1]} : vector<16x512xf32> to vector<8x512xf32>
    %228 = arith.mulf %226, %227 : vector<8x512xf32>
    %229 = vector.extract_strided_slice %218 {offsets = [8, 0], sizes = [8, 512], strides = [1, 1]} : vector<16x512xf32> to vector<8x512xf32>
    %230 = vector.extract_strided_slice %218 {offsets = [8, 0], sizes = [8, 512], strides = [1, 1]} : vector<16x512xf32> to vector<8x512xf32>
    %231 = arith.mulf %229, %230 : vector<8x512xf32>
    %232 = arith.addf %228, %231 : vector<8x512xf32>
    %233 = arith.subf %225, %232 : vector<8x512xf32>
    %cst_60 = arith.constant dense<0.000000e+00> : vector<512xf32>
    %234 = vector.multi_reduction <add>, %233, %cst_60 [0] : vector<8x512xf32> to vector<512xf32>
    %235 = vector.shape_cast %234 : vector<512xf32> to vector<1x512xf32>
    %c0_61 = arith.constant 0 : index
    %236 = memref.load %arg1[%c0_61] : memref<2xf32, #tpu.memory_space<smem>>
    %237 = vector.broadcast %236 : f32 to vector<1x512xf32>
    %238 = arith.addf %235, %237 : vector<1x512xf32>
    %c1_62 = arith.constant 1 : index
    %239 = memref.load %arg1[%c1_62] : memref<2xf32, #tpu.memory_space<smem>>
    %240 = vector.broadcast %239 : f32 to vector<1x512xf32>
    %241 = arith.mulf %238, %240 : vector<1x512xf32>
    %c0_63 = arith.constant 0 : index
    %c0_64 = arith.constant 0 : index
    %242 = vector.load %arg4[%c0_63, %c0_64] : memref<1x512xf32, #tpu.memory_space<vmem>>, vector<1x512xf32>
    tpu.vector_store %arg4[%c0_63, %c0_64], %241 {strides = array<i32>} : memref<1x512xf32, #tpu.memory_space<vmem>>, vector<1x512xf32>,
    return
  }
  func.func @transform_0(%arg0: i32) -> i32 {
    %c0_i32 = arith.constant 0 : i32
    %c0_i32_0 = arith.constant 0 : i32
    return %c0_i32 : i32
  }
  func.func @transform_1(%arg0: i32) -> (i32, i32) {
    %c0_i32 = arith.constant 0 : i32
    %c0_i32_0 = arith.constant 0 : i32
    return %c0_i32, %arg0 : i32, i32
  }
  func.func @transform_2(%arg0: i32) -> (i32, i32, i32) {
    %c0_i32 = arith.constant 0 : i32
    %c0_i32_0 = arith.constant 0 : i32
    %c0_i32_1 = arith.constant 0 : i32
    %c0_i32_2 = arith.constant 0 : i32
    return %c0_i32, %c0_i32_0, %c0_i32_1 : i32, i32, i32
  }
  func.func @transform_3(%arg0: i32) -> (i32, i32) {
    %c0_i32 = arith.constant 0 : i32
    %c0_i32_0 = arith.constant 0 : i32
    return %c0_i32, %arg0 : i32, i32
  }
}

</mosaic_0001>

<llo_original>
// kernel: bvqc_forward.1
$region0: #{bvqc_forward.1}
  #allocation0 [shape = 'u32[]', space=smem, size = 0x4, offset = 0x4, fixed_abs, tag = 'smem constant byte address 0x4 - core index']
  #allocation1 [shape = 'u32[144,128]{1,0:T(1,128)}', space=vmem, size = 0x12000, scoped, tag = 'internal scratch']
  %s0 = inlined_call_operand.vmem [shape: f32[2], index: 0, kind: input, shape index: {}]
  %s1 = inlined_call_operand.vmem [shape: f32[8,1024], index: 1, kind: input, shape index: {}]
  %s2 = inlined_call_operand.vmem [shape: f32[2,32,32], index: 2, kind: input, shape index: {}]
  %s3 = inlined_call_operand.hbm [shape: f32[1,1024], index: 3, kind: output, shape index: {}]
  %s4 = sld [smem:[#allocation0]]
  $region49: #{bvqc_forward.1} parent=0
    _
  %s6 = ssub.s32 1, %s4
  %s7 = scalar_select 0, %s6, %s4
  $region1: #{bvqc_forward.1} parent=0
    #allocation2 [shape = 'u8[512]{0}', space=smem, size = 0x200, scoped, tag = 'input window, operand 0, single buffered']
    #allocation3 [shape = 's32[2]{0}', space=sflag, size = 0x8, scoped, tag = 'scoped memory for bvqc_forward.1']
    #allocation4 [shape = 's32[2]{0}', space=sflag, size = 0x8, scoped, tag = 'scoped memory for bvqc_forward.1']
    #allocation5 [shape = 'u8[4096]{0}', space=vmem, size = 0x1000, scoped, tag = 'output window, operand 0']
    %8 = vsyncpa [#allocation4], 0
    %9 = vsyncpa [#allocation3], 0
    %s10 = scalar_lea.sflag [#allocation3], 1
    %11 = vsyncpa %s10, 0
    loop: start=0, step=1, limit=4
    $region2: #{bvqc_forward.1} parent=1 // loop_pre_header
      _
    $region3: #{bvqc_forward.1} parent=1 // loop_header
      %s13 = sphi 0, %s17
      %p14 = scmp.ge.s32.totalorder %s13, 4
      %s21 = sphi 0, %s21
      %s23 = sphi 0, %s21
      %s24 = sphi 0, %s23
      %s38 = sphi 0, %s24
      %s44 = sphi 0, %s46
      %s47 = sphi 0, %s44
      %s48 = sphi 0, %s47
      %s64 = sphi 0, %s48
      %s68 = sphi 0, %s68
      %s70 = sphi 0, %s68
      %s71 = sphi 0, %s70
      %s85 = sphi 0, %s71
      %s91 = sphi 0, %s93
      %s94 = sphi 0, %s91
      %s95 = sphi 0, %s94
      %s111 = sphi 0, %s95
    $region4: #{bvqc_forward.1} parent=1 // loop_header_branch
      %16 = sbr.rel (%p14) target = $region8
    $region5: #{bvqc_forward.1} parent=1 // loop_body
      %s18 = ssub.s32 %s13, 1
      %s19 = ssub.s32 %s13, 2
      %s20 = sadd.s32 %s13, 1
      %s22 = sadd.s32 %s21, 1
      %p25 = scmp.eq.s32.totalorder %s13, 1
      %p26 = scmp.ne.s32.totalorder %s21, %s23
      %p27 = scmp.eq.s32.totalorder %s13, 0
      %p28 = por %p26, %p27
      %p29 = scmp.ne.s32.totalorder %s21, %s23
      %p30 = scmp.eq.s32.totalorder %s18, 1
      %p31 = por %p29, %p30
      %p32 = scmp.ne.s32.totalorder %s23, %s24
      %p33 = scmp.eq.s32.totalorder %s18, 0
      %p34 = por %p32, %p33
      %p35 = scmp.ne.s32.totalorder %s23, %s24
      %p36 = scmp.eq.s32.totalorder %s19, 1
      %p37 = por %p35, %p36
      %p39 = scmp.ne.s32.totalorder %s24, %s38
      %p40 = scmp.eq.s32.totalorder %s19, 0
      %p41 = por %p39, %p40
      %s42 = ssub.s32 %s13, %s20
      %p43 = scmp.eq.s32.totalorder %s42, 0
      %s45 = sadd.s32 %s44, 1
      %s46 = scalar_select %p43, %s44, %s45
      %p49 = pneg %p43
      %p50 = scmp.eq.s32.totalorder %s13, 1
      %p51 = por %p49, %p50
      %p52 = scmp.ne.s32.totalorder %s44, %s47
      %p53 = scmp.eq.s32.totalorder %s13, 0
      %p54 = por %p52, %p53
      %p55 = scmp.ne.s32.totalorder %s44, %s47
      %p56 = scmp.eq.s32.totalorder %s18, 1
      %p57 = por %p55, %p56
      %p58 = scmp.ne.s32.totalorder %s47, %s48
      %p59 = scmp.eq.s32.totalorder %s18, 0
      %p60 = por %p58, %p59
      %p61 = scmp.ne.s32.totalorder %s47, %s48
      %p62 = scmp.eq.s32.totalorder %s19, 1
      %p63 = por %p61, %p62
      %p65 = scmp.ne.s32.totalorder %s48, %s64
      %p66 = scmp.eq.s32.totalorder %s19, 0
      %p67 = por %p65, %p66
      %s69 = sadd.s32 %s68, 1
      %p72 = scmp.eq.s32.totalorder %s13, 1
      %p73 = scmp.ne.s32.totalorder %s68, %s70
      %p74 = scmp.eq.s32.totalorder %s13, 0
      %p75 = por %p73, %p74
      %p76 = scmp.ne.s32.totalorder %s68, %s70
      %p77 = scmp.eq.s32.totalorder %s18, 1
      %p78 = por %p76, %p77
      %p79 = scmp.ne.s32.totalorder %s70, %s71
      %p80 = scmp.eq.s32.totalorder %s18, 0
      %p81 = por %p79, %p80
      %p82 = scmp.ne.s32.totalorder %s70, %s71
      %p83 = scmp.eq.s32.totalorder %s19, 1
      %p84 = por %p82, %p83
      %p86 = scmp.ne.s32.totalorder %s71, %s85
      %p87 = scmp.eq.s32.totalorder %s19, 0
      %p88 = por %p86, %p87
      %s89 = ssub.s32 %s13, %s20
      %p90 = scmp.eq.s32.totalorder %s89, 0
      %s92 = sadd.s32 %s91, 1
      %s93 = scalar_select %p90, %s91, %s92
      %p96 = pneg %p90
      %p97 = scmp.eq.s32.totalorder %s13, 1
      %p98 = por %p96, %p97
      %p99 = scmp.ne.s32.totalorder %s91, %s94
      %p100 = scmp.eq.s32.totalorder %s13, 0
      %p101 = por %p99, %p100
      %p102 = scmp.ne.s32.totalorder %s91, %s94
      %p103 = scmp.eq.s32.totalorder %s18, 1
      %p104 = por %p102, %p103
      %p105 = scmp.ne.s32.totalorder %s94, %s95
      %p106 = scmp.eq.s32.totalorder %s18, 0
      %p107 = por %p105, %p106
      %p108 = scmp.ne.s32.totalorder %s94, %s95
      %p109 = scmp.eq.s32.totalorder %s19, 1
      %p110 = por %p108, %p109
      %p112 = scmp.ne.s32.totalorder %s95, %s111
      %p113 = scmp.eq.s32.totalorder %s19, 0
      %p114 = por %p112, %p113
      %p115 = scmp.le.s32.totalorder 1, %s13
      %p116 = scmp.lt.s32.totalorder %s13, 3
      %p117 = pnand %p115, %p116
      %p118 = pneg %p117
      // Predicated region
      $region9: #{bvqc_forward.1} parent=5 // pred_check
        _
      $region10: #{bvqc_forward.1} parent=5 // pred_check_branch
        %120 = sbr.rel (%p117) target = $region12
      $region11: #{bvqc_forward.1} parent=5 // pred_region
        %s121 = ssub.s32 %s13, 1
        // Predicated region
        $region13: #{bvqc_forward.1} parent=11 // pred_check
          %p122 = pneg %p34
        $region14: #{bvqc_forward.1} parent=11 // pred_check_branch
          %124 = sbr.rel (%p122) target = $region16
        $region15: #{bvqc_forward.1} parent=11 // pred_region
          %s126 = ssub.s32 16, 16
          %127 = vsyncadd [#allocation4], %s126
          %s129 = sshll.u32 %s0, 4
          %s130 = int_to_ptr.vmem [resolvable:$true] %s129
          %132 = dma.vmem_to_smem %s130, 16, [#allocation2], [#allocation4]
        $region16: #{bvqc_forward.1} parent=11 // pred_fallthru
          _
        // Predicated region
        $region17: #{bvqc_forward.1} parent=11 // pred_check
          %p133 = pneg %p81
        $region18: #{bvqc_forward.1} parent=11 // pred_check_branch
          %135 = sbr.rel (%p133) target = $region20
        $region19: #{bvqc_forward.1} parent=11 // pred_region
          _
        $region20: #{bvqc_forward.1} parent=11 // pred_fallthru
          _
      $region12: #{bvqc_forward.1} parent=5 // pred_fallthru
        _
      %p136 = scmp.lt.s32.totalorder %s13, 2
      // Predicated region
      $region21: #{bvqc_forward.1} parent=5 // pred_check
        %p137 = pneg %p136
      $region22: #{bvqc_forward.1} parent=5 // pred_check_branch
        %139 = sbr.rel (%p137) target = $region24
      $region23: #{bvqc_forward.1} parent=5 // pred_region
        // Predicated region
        $region25: #{bvqc_forward.1} parent=23 // pred_check
          %p140 = pneg %p54
        $region26: #{bvqc_forward.1} parent=23 // pred_check_branch
          %142 = sbr.rel (%p140) target = $region28
        $region27: #{bvqc_forward.1} parent=23 // pred_region
          %s143 = smul.u32 4, %s13
          %p144 = scmp.lt.s32.totalorder %s143, 7
          %s145 = scalar_select %p144, %s143, 7
          %s146 = smul.addr %s145, 8
          %s147 = scalar_lea.vmem %s1, %s146
          %s148 = smul.u32 4, %s13
        $region28: #{bvqc_forward.1} parent=23 // pred_fallthru
          _
      $region24: #{bvqc_forward.1} parent=5 // pred_fallthru
        _
      %p149 = scmp.le.s32.totalorder 1, %s13
      %p150 = scmp.lt.s32.totalorder %s13, 3
      %p151 = pnand %p149, %p150
      %p152 = pneg %p151
      // Predicated region
      $region29: #{bvqc_forward.1} parent=5 // pred_check
        _
      $region30: #{bvqc_forward.1} parent=5 // pred_check_branch
        %154 = sbr.rel (%p151) target = $region32
      $region31: #{bvqc_forward.1} parent=5 // pred_region
        %s155 = ssub.s32 %s13, 1
        // Predicated region
        $region33: #{bvqc_forward.1} parent=31 // pred_check
          %p156 = pneg %p34
        $region34: #{bvqc_forward.1} parent=31 // pred_check_branch
          %158 = sbr.rel (%p156) target = $region36
        $region35: #{bvqc_forward.1} parent=31 // pred_region
          %159 = dma.done [#allocation4], 16
        $region36: #{bvqc_forward.1} parent=31 // pred_fallthru
          _
        %160 = sfence
        %p161 = pneg %p34
        %p162 = pneg %p31
        %s163 = smul.u32 4, %s18
        %p164 = scmp.lt.s32.totalorder %s163, 7
        %s165 = scalar_select %p164, %s163, 7
        %s166 = smul.addr %s165, 8
        %s167 = scalar_lea.vmem %s1, %s166
        %p168 = pneg %p60
        %p169 = pneg %p57
        %p170 = pneg %p81
        %p171 = pneg %p78
        %p172 = pneg %p107
        %p173 = pneg %p104
        %s174 = sand.u32 %s94, 1
        %s175 = scalar_lea.sflag [#allocation3], %s174
        %s176 = sand.u32 %s94, 1
        %s177 = smul.addr %s176, 4
        %s178 = scalar_lea.vmem [#allocation5], %s177
        %s179 = smul.u32 4, %s18
        %p180 = scmp.lt.s32.totalorder %s179, 7
        %s181 = scalar_select %p180, %s179, 7
        %s182 = smul.addr %s181, 8
        %s183 = scalar_lea.vmem %s1, %s182
        %s184 = smul.u32 4, %s18
        %s185 = smul.u32 4, %s18
        %v186 = vlaneseq
        %v187 = vshrl.u32 %v186, 7
        %v188 = vadd.s32 %v187, 8
        %v189 = vshra.s32 %v187, 3
        %v190 = vshra.s32 %v188, 3
        %v191 = vand.u32 %v189, 1
        %v192 = vand.u32 %v190, 1
        %vm193 = vcmp.eq.s32.totalorder %v191, 0
        %vm194 = vcmp.eq.s32.totalorder %v192, 0
        %v195 = vld [vmem:[%s183] ss:$8 sm:$0xf]
        %s196 = scalar_lea.vmem %s183, 4
        %v197 = vld [vmem:[%s196] ss:$8 sm:$0xf]
        %v199 = vlaneseq
        %v200 = vshrl.u32 %v199, 7
        %v201 = vsub.s32 0, %v200
        %v202 = vrot.slane %v195, %v201
        %v203 = vlaneseq
        %v204 = vshrl.u32 %v203, 7
        %v205 = vsub.s32 1, %v204
        %v206 = vrot.slane %v195, %v205
        %v207 = vlaneseq
        %v208 = vshrl.u32 %v207, 7
        %v209 = vsub.s32 2, %v208
        %v210 = vrot.slane %v195, %v209
        %v211 = vlaneseq
        %v212 = vshrl.u32 %v211, 7
        %v213 = vsub.s32 3, %v212
        %v214 = vrot.slane %v195, %v213
        %v220 = vlaneseq
        %v221 = vshrl.u32 %v220, 7
        %v222 = vsub.s32 0, %v221
        %v223 = vrot.slane %v197, %v222
        %v224 = vlaneseq
        %v225 = vshrl.u32 %v224, 7
        %v226 = vsub.s32 1, %v225
        %v227 = vrot.slane %v197, %v226
        %v228 = vlaneseq
        %v229 = vshrl.u32 %v228, 7
        %v230 = vsub.s32 2, %v229
        %v231 = vrot.slane %v197, %v230
        %v232 = vlaneseq
        %v233 = vshrl.u32 %v232, 7
        %v234 = vsub.s32 3, %v233
        %v235 = vrot.slane %v197, %v234
        %v240 = vsel %vm193, %v202, %v223
        %v241 = vsel %vm193, %v206, %v227
        %v242 = vsel %vm193, %v210, %v231
        %v243 = vsel %vm193, %v214, %v235
        %v244 = vsel %vm194, %v202, %v223
        %v245 = vsel %vm194, %v206, %v227
        %v246 = vsel %vm194, %v210, %v231
        %v247 = vsel %vm194, %v214, %v235
        %v248 = vshra.s32 %v187, 2
        %v249 = vshra.s32 %v188, 2
        %v250 = vand.u32 %v248, 1
        %v251 = vand.u32 %v249, 1
        %vm252 = vcmp.eq.s32.totalorder %v250, 0
        %vm253 = vcmp.eq.s32.totalorder %v251, 0
        %s254 = scalar_lea.vmem %s183, 1
        %v255 = vld [vmem:[%s254] ss:$8 sm:$0xf]
        %s256 = scalar_lea.vmem %s183, 5
        %v257 = vld [vmem:[%s256] ss:$8 sm:$0xf]
        %v259 = vlaneseq
        %v260 = vshrl.u32 %v259, 7
        %v261 = vsub.s32 0, %v260
        %v262 = vrot.slane %v255, %v261
        %v263 = vlaneseq
        %v264 = vshrl.u32 %v263, 7
        %v265 = vsub.s32 1, %v264
        %v266 = vrot.slane %v255, %v265
        %v267 = vlaneseq
        %v268 = vshrl.u32 %v267, 7
        %v269 = vsub.s32 2, %v268
        %v270 = vrot.slane %v255, %v269
        %v271 = vlaneseq
        %v272 = vshrl.u32 %v271, 7
        %v273 = vsub.s32 3, %v272
        %v274 = vrot.slane %v255, %v273
        %v280 = vlaneseq
        %v281 = vshrl.u32 %v280, 7
        %v282 = vsub.s32 0, %v281
        %v283 = vrot.slane %v257, %v282
        %v284 = vlaneseq
        %v285 = vshrl.u32 %v284, 7
        %v286 = vsub.s32 1, %v285
        %v287 = vrot.slane %v257, %v286
        %v288 = vlaneseq
        %v289 = vshrl.u32 %v288, 7
        %v290 = vsub.s32 2, %v289
        %v291 = vrot.slane %v257, %v290
        %v292 = vlaneseq
        %v293 = vshrl.u32 %v292, 7
        %v294 = vsub.s32 3, %v293
        %v295 = vrot.slane %v257, %v294
        %v300 = vsel %vm252, %v262, %v283
        %v301 = vsel %vm252, %v266, %v287
        %v302 = vsel %vm252, %v270, %v291
        %v303 = vsel %vm252, %v274, %v295
        %v304 = vsel %vm253, %v262, %v283
        %v305 = vsel %vm253, %v266, %v287
        %v306 = vsel %vm253, %v270, %v291
        %v307 = vsel %vm253, %v274, %v295
        %v308 = vmul.f32 %v240, %v300
        %v309 = vmul.f32 %v241, %v301
        %v310 = vmul.f32 %v242, %v302
        %v311 = vmul.f32 %v243, %v303
        %v312 = vmul.f32 %v244, %v304
        %v313 = vmul.f32 %v245, %v305
        %v314 = vmul.f32 %v246, %v306
        %v315 = vmul.f32 %v247, %v307
        %v316 = vadd.s32 %v191, %v250
        %v317 = vadd.s32 %v192, %v251
        %v318 = vshra.s32 %v187, 1
        %v319 = vshra.s32 %v188, 1
        %v320 = vand.u32 %v318, 1
        %v321 = vand.u32 %v319, 1
        %vm322 = vcmp.eq.s32.totalorder %v320, 0
        %vm323 = vcmp.eq.s32.totalorder %v321, 0
        %s324 = scalar_lea.vmem %s183, 2
        %v325 = vld [vmem:[%s324] ss:$8 sm:$0xf]
        %s326 = scalar_lea.vmem %s183, 6
        %v327 = vld [vmem:[%s326] ss:$8 sm:$0xf]
        %v329 = vlaneseq
        %v330 = vshrl.u32 %v329, 7
        %v331 = vsub.s32 0, %v330
        %v332 = vrot.slane %v325, %v331
        %v333 = vlaneseq
        %v334 = vshrl.u32 %v333, 7
        %v335 = vsub.s32 1, %v334
        %v336 = vrot.slane %v325, %v335
        %v337 = vlaneseq
        %v338 = vshrl.u32 %v337, 7
        %v339 = vsub.s32 2, %v338
        %v340 = vrot.slane %v325, %v339
        %v341 = vlaneseq
        %v342 = vshrl.u32 %v341, 7
        %v343 = vsub.s32 3, %v342
        %v344 = vrot.slane %v325, %v343
        %v350 = vlaneseq
        %v351 = vshrl.u32 %v350, 7
        %v352 = vsub.s32 0, %v351
        %v353 = vrot.slane %v327, %v352
        %v354 = vlaneseq
        %v355 = vshrl.u32 %v354, 7
        %v356 = vsub.s32 1, %v355
        %v357 = vrot.slane %v327, %v356
        %v358 = vlaneseq
        %v359 = vshrl.u32 %v358, 7
        %v360 = vsub.s32 2, %v359
        %v361 = vrot.slane %v327, %v360
        %v362 = vlaneseq
        %v363 = vshrl.u32 %v362, 7
        %v364 = vsub.s32 3, %v363
        %v365 = vrot.slane %v327, %v364
        %v370 = vsel %vm322, %v332, %v353
        %v371 = vsel %vm322, %v336, %v357
        %v372 = vsel %vm322, %v340, %v361
        %v373 = vsel %vm322, %v344, %v365
        %v374 = vsel %vm323, %v332, %v353
        %v375 = vsel %vm323, %v336, %v357
        %v376 = vsel %vm323, %v340, %v361
        %v377 = vsel %vm323, %v344, %v365
        %v378 = vmul.f32 %v308, %v370
        %v379 = vmul.f32 %v309, %v371
        %v380 = vmul.f32 %v310, %v372
        %v381 = vmul.f32 %v311, %v373
        %v382 = vmul.f32 %v312, %v374
        %v383 = vmul.f32 %v313, %v375
        %v384 = vmul.f32 %v314, %v376
        %v385 = vmul.f32 %v315, %v377
        %v386 = vadd.s32 %v316, %v320
        %v387 = vadd.s32 %v317, %v321
        %v388 = vand.u32 %v187, 1
        %v389 = vand.u32 %v188, 1
        %vm390 = vcmp.eq.s32.totalorder %v388, 0
        %vm391 = vcmp.eq.s32.totalorder %v389, 0
        %s392 = scalar_lea.vmem %s183, 3
        %v393 = vld [vmem:[%s392] ss:$8 sm:$0xf]
        %s394 = scalar_lea.vmem %s183, 7
        %v395 = vld [vmem:[%s394] ss:$8 sm:$0xf]
        %v397 = vlaneseq
        %v398 = vshrl.u32 %v397, 7
        %v399 = vsub.s32 0, %v398
        %v400 = vrot.slane %v393, %v399
        %v401 = vlaneseq
        %v402 = vshrl.u32 %v401, 7
        %v403 = vsub.s32 1, %v402
        %v404 = vrot.slane %v393, %v403
        %v405 = vlaneseq
        %v406 = vshrl.u32 %v405, 7
        %v407 = vsub.s32 2, %v406
        %v408 = vrot.slane %v393, %v407
        %v409 = vlaneseq
        %v410 = vshrl.u32 %v409, 7
        %v411 = vsub.s32 3, %v410
        %v412 = vrot.slane %v393, %v411
        %v418 = vlaneseq
        %v419 = vshrl.u32 %v418, 7
        %v420 = vsub.s32 0, %v419
        %v421 = vrot.slane %v395, %v420
        %v422 = vlaneseq
        %v423 = vshrl.u32 %v422, 7
        %v424 = vsub.s32 1, %v423
        %v425 = vrot.slane %v395, %v424
        %v426 = vlaneseq
        %v427 = vshrl.u32 %v426, 7
        %v428 = vsub.s32 2, %v427
        %v429 = vrot.slane %v395, %v428
        %v430 = vlaneseq
        %v431 = vshrl.u32 %v430, 7
        %v432 = vsub.s32 3, %v431
        %v433 = vrot.slane %v395, %v432
        %v438 = vsel %vm390, %v400, %v421
        %v439 = vsel %vm390, %v404, %v425
        %v440 = vsel %vm390, %v408, %v429
        %v441 = vsel %vm390, %v412, %v433
        %v442 = vsel %vm391, %v400, %v421
        %v443 = vsel %vm391, %v404, %v425
        %v444 = vsel %vm391, %v408, %v429
        %v445 = vsel %vm391, %v412, %v433
        %v446 = vmul.f32 %v378, %v438
        %v447 = vmul.f32 %v379, %v439
        %v448 = vmul.f32 %v380, %v440
        %v449 = vmul.f32 %v381, %v441
        %v450 = vmul.f32 %v382, %v442
        %v451 = vmul.f32 %v383, %v443
        %v452 = vmul.f32 %v384, %v444
        %v453 = vmul.f32 %v385, %v445
        %v454 = vadd.s32 %v386, %v388
        %v455 = vadd.s32 %v387, %v389
        %v456 = vand.u32 %v454, 3
        %v457 = vand.u32 %v455, 3
        %vm458 = vcmp.eq.s32.totalorder %v456, 0
        %vm459 = vcmp.eq.s32.totalorder %v457, 0
        %vm460 = vcmp.eq.s32.totalorder %v456, 2
        %vm461 = vcmp.eq.s32.totalorder %v457, 2
        %v462 = vsub.f32 0.0, %v446
        %v463 = vsub.f32 0.0, %v447
        %v464 = vsub.f32 0.0, %v448
        %v465 = vsub.f32 0.0, %v449
        %v466 = vsub.f32 0.0, %v450
        %v467 = vsub.f32 0.0, %v451
        %v468 = vsub.f32 0.0, %v452
        %v469 = vsub.f32 0.0, %v453
        %v470 = vsel %vm460, %v462, 0.0
        %v471 = vsel %vm460, %v463, 0.0
        %v472 = vsel %vm460, %v464, 0.0
        %v473 = vsel %vm460, %v465, 0.0
        %v474 = vsel %vm461, %v466, 0.0
        %v475 = vsel %vm461, %v467, 0.0
        %v476 = vsel %vm461, %v468, 0.0
        %v477 = vsel %vm461, %v469, 0.0
        %v478 = vsel %vm458, %v446, %v470
        %v479 = vsel %vm458, %v447, %v471
        %v480 = vsel %vm458, %v448, %v472
        %v481 = vsel %vm458, %v449, %v473
        %v482 = vsel %vm459, %v450, %v474
        %v483 = vsel %vm459, %v451, %v475
        %v484 = vsel %vm459, %v452, %v476
        %v485 = vsel %vm459, %v453, %v477
        %vm486 = vcmp.eq.s32.totalorder %v456, 3
        %vm487 = vcmp.eq.s32.totalorder %v457, 3
        %vm488 = vcmp.eq.s32.totalorder %v456, 1
        %vm489 = vcmp.eq.s32.totalorder %v457, 1
        %v490 = vsel %vm488, %v462, 0.0
        %v491 = vsel %vm488, %v463, 0.0
        %v492 = vsel %vm488, %v464, 0.0
        %v493 = vsel %vm488, %v465, 0.0
        %v494 = vsel %vm489, %v466, 0.0
        %v495 = vsel %vm489, %v467, 0.0
        %v496 = vsel %vm489, %v468, 0.0
        %v497 = vsel %vm489, %v469, 0.0
        %v498 = vsel %vm486, %v446, %v490
        %v499 = vsel %vm486, %v447, %v491
        %v500 = vsel %vm486, %v448, %v492
        %v501 = vsel %vm486, %v449, %v493
        %v502 = vsel %vm487, %v450, %v494
        %v503 = vsel %vm487, %v451, %v495
        %v504 = vsel %vm487, %v452, %v496
        %v505 = vsel %vm487, %v453, %v497
        %v506 = vld [vmem:[%s2] sm:$0xff]
        %v507 = vld [vmem:[%s2 + $0x8] sm:$0xff]
        %v508 = vld [vmem:[%s2 + $0x10] sm:$0xff]
        %v509 = vld [vmem:[%s2 + $0x18] sm:$0xff]
        %vm510 = vcmask 261120
        %v512 = vsel %vm510, %v506, 0
        %v515 = vsel %vm510, %v507, 0
        %v518 = vsel %vm510, %v508, 0
        %v521 = vsel %vm510, %v509, 0
        %523 = vmatprep.subr.mxu0 %v479
        %524 = vmatpush1.msra.mxu0 %v478
        %525 = vmatprep.subr.mxu0 %v483
        %526 = vmatpush1.msra.mxu0 %v482
        %527 = vmatprep.subr.mxu0 %v499
        %528 = vmatpush1.msra.mxu0 %v498
        %529 = vmatprep.subr.mxu0 %v503
        %530 = vmatpush1.msra.mxu0 %v502
        %531 = vmatprep.subr.mxu0 0.0
        %532 = vmatpush1.msra.mxu0 0.0
        %533 = vmatprep.subr.mxu0 0.0
        %534 = vmatpush1.msra.mxu0 0.0
        %535 = vmatprep.subr.mxu0 0.0
        %536 = vmatpush1.msra.mxu0 0.0
        %537 = vmatprep.subr.mxu0 0.0
        %538 = vmatpush1.msra.mxu0 0.0
        %539 = vmatprep.subr.mxu0 0.0
        %540 = vmatpush1.msra.mxu0 0.0
        %541 = vmatprep.subr.mxu0 0.0
        %542 = vmatpush1.msra.mxu0 0.0
        %543 = vmatprep.subr.mxu0 0.0
        %544 = vmatpush1.msra.mxu0 0.0
        %545 = vmatprep.subr.mxu0 0.0
        %546 = vmatpush1.msra.mxu0 0.0
        %547 = vmatprep.subr.mxu0 0.0
        %548 = vmatpush1.msra.mxu0 0.0
        %549 = vmatprep.subr.mxu0 0.0
        %550 = vmatpush1.msra.mxu0 0.0
        %551 = vmatprep.subr.mxu0 0.0
        %552 = vmatpush1.msra.mxu0 0.0
        %553 = vmatprep.subr.mxu0 0.0
        %554 = vmatpush1.msra.mxu0 0.0
        %555 = vmatprep.subr.mxu0 0.0
        %556 = vmatpush1.msra.mxu0 0.0
        %557 = vmatprep.subr.mxu0 0.0
        %558 = vmatpush1.msra.mxu0 0.0
        %559 = vmatprep.subr.mxu0 0.0
        %560 = vmatpush1.msra.mxu0 0.0
        %561 = vmatprep.subr.mxu0 0.0
        %562 = vmatpush1.msra.mxu0 0.0
        %563 = vmatprep.subr.mxu0 0.0
        %564 = vmatpush1.msra.mxu0 0.0
        %565 = vmatprep.subr.mxu0 0.0
        %566 = vmatpush1.msra.mxu0 0.0
        %567 = vmatprep.subr.mxu0 0.0
        %568 = vmatpush1.msra.mxu0 0.0
        %569 = vmatprep.subr.mxu0 0.0
        %570 = vmatpush1.msra.mxu0 0.0
        %571 = vmatprep.subr.mxu0 0.0
        %572 = vmatpush1.msra.mxu0 0.0
        %573 = vmatprep.subr.mxu0 0.0
        %574 = vmatpush1.msra.mxu0 0.0
        %575 = vmatprep.subr.mxu0 0.0
        %576 = vmatpush1.msra.mxu0 0.0
        %577 = vmatprep.subr.mxu0 0.0
        %578 = vmatpush1.msra.mxu0 0.0
        %579 = vmatprep.subr.mxu0 0.0
        %580 = vmatpush1.msra.mxu0 0.0
        %581 = vmatprep.subr.mxu0 0.0
        %582 = vmatpush1.msra.mxu0 0.0
        %583 = vmatprep.subr.mxu0 0.0
        %584 = vmatpush1.msra.mxu0 0.0
        %585 = vmatprep.subr.mxu0 0.0
        %586 = vmatpush1.msra.mxu0 0.0
        %587 = vmatprep.mubr.f32.mxu0 0.0
        %588 = vmatmul.mubr.f32.gmra.mrb[0].mxu0 %v512
        %v589 = vpop.f32.mrb[0].mxu0
        %v590 = vadd.f32 0.0, %v589
        %v591 = vpop.f32.mrb[0].mxu0
        %v592 = vadd.f32 0.0, %v591
        %593 = vmatprep.mubr.f32.mxu0 0.0
        %594 = vmatmul.mubr.f32.gmra.mrb[0].mxu0 %v515
        %v595 = vpop.f32.mrb[0].mxu0
        %v596 = vadd.f32 0.0, %v595
        %v597 = vpop.f32.mrb[0].mxu0
        %v598 = vadd.f32 0.0, %v597
        %599 = vmatprep.mubr.f32.mxu0 0.0
        %600 = vmatmul.mubr.f32.gmra.mrb[0].mxu0 %v518
        %v601 = vpop.f32.mrb[0].mxu0
        %v602 = vadd.f32 0.0, %v601
        %v603 = vpop.f32.mrb[0].mxu0
        %v604 = vadd.f32 0.0, %v603
        %605 = vmatprep.mubr.f32.mxu0 0.0
        %606 = vmatmul.mubr.f32.gmra.mrb[0].mxu0 %v521
        %v607 = vpop.f32.mrb[0].mxu0
        %v608 = vadd.f32 0.0, %v607
        %v609 = vpop.f32.mrb[0].mxu0
        %v610 = vadd.f32 0.0, %v609
        %611 = vdwg.mxu0
        %612 = vmatprep.subr.mxu0 %v481
        %613 = vmatpush1.msra.mxu0 %v480
        %614 = vmatprep.subr.mxu0 %v485
        %615 = vmatpush1.msra.mxu0 %v484
        %616 = vmatprep.subr.mxu0 %v501
        %617 = vmatpush1.msra.mxu0 %v500
        %618 = vmatprep.subr.mxu0 %v505
        %619 = vmatpush1.msra.mxu0 %v504
        %620 = vmatprep.subr.mxu0 0.0
        %621 = vmatpush1.msra.mxu0 0.0
        %622 = vmatprep.subr.mxu0 0.0
        %623 = vmatpush1.msra.mxu0 0.0
        %624 = vmatprep.subr.mxu0 0.0
        %625 = vmatpush1.msra.mxu0 0.0
        %626 = vmatprep.subr.mxu0 0.0
        %627 = vmatpush1.msra.mxu0 0.0
        %628 = vmatprep.subr.mxu0 0.0
        %629 = vmatpush1.msra.mxu0 0.0
        %630 = vmatprep.subr.mxu0 0.0
        %631 = vmatpush1.msra.mxu0 0.0
        %632 = vmatprep.subr.mxu0 0.0
        %633 = vmatpush1.msra.mxu0 0.0
        %634 = vmatprep.subr.mxu0 0.0
        %635 = vmatpush1.msra.mxu0 0.0
        %636 = vmatprep.subr.mxu0 0.0
        %637 = vmatpush1.msra.mxu0 0.0
        %638 = vmatprep.subr.mxu0 0.0
        %639 = vmatpush1.msra.mxu0 0.0
        %640 = vmatprep.subr.mxu0 0.0
        %641 = vmatpush1.msra.mxu0 0.0
        %642 = vmatprep.subr.mxu0 0.0
        %643 = vmatpush1.msra.mxu0 0.0
        %644 = vmatprep.subr.mxu0 0.0
        %645 = vmatpush1.msra.mxu0 0.0
        %646 = vmatprep.subr.mxu0 0.0
        %647 = vmatpush1.msra.mxu0 0.0
        %648 = vmatprep.subr.mxu0 0.0
        %649 = vmatpush1.msra.mxu0 0.0
        %650 = vmatprep.subr.mxu0 0.0
        %651 = vmatpush1.msra.mxu0 0.0
        %652 = vmatprep.subr.mxu0 0.0
        %653 = vmatpush1.msra.mxu0 0.0
        %654 = vmatprep.subr.mxu0 0.0
        %655 = vmatpush1.msra.mxu0 0.0
        %656 = vmatprep.subr.mxu0 0.0
        %657 = vmatpush1.msra.mxu0 0.0
        %658 = vmatprep.subr.mxu0 0.0
        %659 = vmatpush1.msra.mxu0 0.0
        %660 = vmatprep.subr.mxu0 0.0
        %661 = vmatpush1.msra.mxu0 0.0
        %662 = vmatprep.subr.mxu0 0.0
        %663 = vmatpush1.msra.mxu0 0.0
        %664 = vmatprep.subr.mxu0 0.0
        %665 = vmatpush1.msra.mxu0 0.0
        %666 = vmatprep.subr.mxu0 0.0
        %667 = vmatpush1.msra.mxu0 0.0
        %668 = vmatprep.subr.mxu0 0.0
        %669 = vmatpush1.msra.mxu0 0.0
        %670 = vmatprep.subr.mxu0 0.0
        %671 = vmatpush1.msra.mxu0 0.0
        %672 = vmatprep.subr.mxu0 0.0
        %673 = vmatpush1.msra.mxu0 0.0
        %674 = vmatprep.subr.mxu0 0.0
        %675 = vmatpush1.msra.mxu0 0.0
        %676 = vmatprep.mubr.f32.mxu0 0.0
        %677 = vmatmul.mubr.f32.gmra.mrb[0].mxu0 %v512
        %v678 = vpop.f32.mrb[0].mxu0
        %v679 = vadd.f32 0.0, %v678
        %v680 = vpop.f32.mrb[0].mxu0
        %v681 = vadd.f32 0.0, %v680
        %682 = vmatprep.mubr.f32.mxu0 0.0
        %683 = vmatmul.mubr.f32.gmra.mrb[0].mxu0 %v515
        %v684 = vpop.f32.mrb[0].mxu0
        %v685 = vadd.f32 0.0, %v684
        %v686 = vpop.f32.mrb[0].mxu0
        %v687 = vadd.f32 0.0, %v686
        %688 = vmatprep.mubr.f32.mxu0 0.0
        %689 = vmatmul.mubr.f32.gmra.mrb[0].mxu0 %v518
        %v690 = vpop.f32.mrb[0].mxu0
        %v691 = vadd.f32 0.0, %v690
        %v692 = vpop.f32.mrb[0].mxu0
        %v693 = vadd.f32 0.0, %v692
        %694 = vmatprep.mubr.f32.mxu0 0.0
        %695 = vmatmul.mubr.f32.gmra.mrb[0].mxu0 %v521
        %v696 = vpop.f32.mrb[0].mxu0
        %v697 = vadd.f32 0.0, %v696
        %v698 = vpop.f32.mrb[0].mxu0
        %v699 = vadd.f32 0.0, %v698
        %700 = vdwg.mxu0
        %v701 = vmul.f32 %v202, %v590
        %v702 = vmul.f32 %v206, %v592
        %v703 = vmul.f32 %v210, %v679
        %v704 = vmul.f32 %v214, %v681
        %v705 = vmul.f32 %v202, %v596
        %v706 = vmul.f32 %v206, %v598
        %v707 = vmul.f32 %v210, %v685
        %v708 = vmul.f32 %v214, %v687
        %v709 = vmul.f32 %v223, %v608
        %v710 = vmul.f32 %v227, %v610
        %v711 = vmul.f32 %v231, %v697
        %v712 = vmul.f32 %v235, %v699
        %v713 = vmul.f32 %v223, %v602
        %v714 = vmul.f32 %v227, %v604
        %v715 = vmul.f32 %v231, %v691
        %v716 = vmul.f32 %v235, %v693
        %v717 = vadd.f32 %v701, %v709
        %v718 = vadd.f32 %v702, %v710
        %v719 = vadd.f32 %v703, %v711
        %v720 = vadd.f32 %v704, %v712
        %v721 = vadd.f32 %v705, %v713
        %v722 = vadd.f32 %v706, %v714
        %v723 = vadd.f32 %v707, %v715
        %v724 = vadd.f32 %v708, %v716
        %v725 = vmul.f32 %v202, %v602
        %v726 = vmul.f32 %v206, %v604
        %v727 = vmul.f32 %v210, %v691
        %v728 = vmul.f32 %v214, %v693
        %v729 = vmul.f32 %v202, %v608
        %v730 = vmul.f32 %v206, %v610
        %v731 = vmul.f32 %v210, %v697
        %v732 = vmul.f32 %v214, %v699
        %v733 = vmul.f32 %v223, %v596
        %v734 = vmul.f32 %v227, %v598
        %v735 = vmul.f32 %v231, %v685
        %v736 = vmul.f32 %v235, %v687
        %v737 = vmul.f32 %v223, %v590
        %v738 = vmul.f32 %v227, %v592
        %v739 = vmul.f32 %v231, %v679
        %v740 = vmul.f32 %v235, %v681
        %v741 = vsub.f32 %v725, %v733
        %v742 = vsub.f32 %v726, %v734
        %v743 = vsub.f32 %v727, %v735
        %v744 = vsub.f32 %v728, %v736
        %v745 = vsub.f32 %v729, %v737
        %v746 = vsub.f32 %v730, %v738
        %v747 = vsub.f32 %v731, %v739
        %v748 = vsub.f32 %v732, %v740
        %vm757 = vcmask 1043456
        %v758 = vrot.slane %v717, 4
        %v759 = vrot.slane %v721, 4
        %v760 = vsel %vm757, %v758, %v759
        %v761 = vrot.slane %v718, 4
        %v762 = vrot.slane %v722, 4
        %v763 = vsel %vm757, %v761, %v762
        %v764 = vrot.slane %v719, 4
        %v765 = vrot.slane %v723, 4
        %v766 = vsel %vm757, %v764, %v765
        %v767 = vrot.slane %v720, 4
        %v768 = vrot.slane %v724, 4
        %v769 = vsel %vm757, %v767, %v768
        %v782 = vsel %vm757, %v759, %v758
        %v783 = vsel %vm757, %v762, %v761
        %v784 = vsel %vm757, %v765, %v764
        %v785 = vsel %vm757, %v768, %v767
        %v786 = vsel %vm252, %v760, %v782
        %v787 = vsel %vm252, %v763, %v783
        %v788 = vsel %vm252, %v766, %v784
        %v789 = vsel %vm252, %v769, %v785
        %v790 = vsel %vm253, %v782, %v760
        %v791 = vsel %vm253, %v783, %v763
        %v792 = vsel %vm253, %v784, %v766
        %v793 = vsel %vm253, %v785, %v769
        %v802 = vrot.slane %v741, 4
        %v803 = vrot.slane %v745, 4
        %v804 = vsel %vm757, %v802, %v803
        %v805 = vrot.slane %v742, 4
        %v806 = vrot.slane %v746, 4
        %v807 = vsel %vm757, %v805, %v806
        %v808 = vrot.slane %v743, 4
        %v809 = vrot.slane %v747, 4
        %v810 = vsel %vm757, %v808, %v809
        %v811 = vrot.slane %v744, 4
        %v812 = vrot.slane %v748, 4
        %v813 = vsel %vm757, %v811, %v812
        %v826 = vsel %vm757, %v803, %v802
        %v827 = vsel %vm757, %v806, %v805
        %v828 = vsel %vm757, %v809, %v808
        %v829 = vsel %vm757, %v812, %v811
        %v830 = vsel %vm252, %v804, %v826
        %v831 = vsel %vm252, %v807, %v827
        %v832 = vsel %vm252, %v810, %v828
        %v833 = vsel %vm252, %v813, %v829
        %v834 = vsel %vm253, %v826, %v804
        %v835 = vsel %vm253, %v827, %v807
        %v836 = vsel %vm253, %v828, %v810
        %v837 = vsel %vm253, %v829, %v813
        %v838 = vmul.f32 %v262, %v717
        %v839 = vmul.f32 %v266, %v718
        %v840 = vmul.f32 %v270, %v719
        %v841 = vmul.f32 %v274, %v720
        %v842 = vmul.f32 %v262, %v721
        %v843 = vmul.f32 %v266, %v722
        %v844 = vmul.f32 %v270, %v723
        %v845 = vmul.f32 %v274, %v724
        %v846 = vmul.f32 %v283, %v830
        %v847 = vmul.f32 %v287, %v831
        %v848 = vmul.f32 %v291, %v832
        %v849 = vmul.f32 %v295, %v833
        %v850 = vmul.f32 %v283, %v834
        %v851 = vmul.f32 %v287, %v835
        %v852 = vmul.f32 %v291, %v836
        %v853 = vmul.f32 %v295, %v837
        %v854 = vadd.f32 %v838, %v846
        %v855 = vadd.f32 %v839, %v847
        %v856 = vadd.f32 %v840, %v848
        %v857 = vadd.f32 %v841, %v849
        %v858 = vadd.f32 %v842, %v850
        %v859 = vadd.f32 %v843, %v851
        %v860 = vadd.f32 %v844, %v852
        %v861 = vadd.f32 %v845, %v853
        %v862 = vmul.f32 %v262, %v741
        %v863 = vmul.f32 %v266, %v742
        %v864 = vmul.f32 %v270, %v743
        %v865 = vmul.f32 %v274, %v744
        %v866 = vmul.f32 %v262, %v745
        %v867 = vmul.f32 %v266, %v746
        %v868 = vmul.f32 %v270, %v747
        %v869 = vmul.f32 %v274, %v748
        %v870 = vmul.f32 %v283, %v786
        %v871 = vmul.f32 %v287, %v787
        %v872 = vmul.f32 %v291, %v788
        %v873 = vmul.f32 %v295, %v789
        %v874 = vmul.f32 %v283, %v790
        %v875 = vmul.f32 %v287, %v791
        %v876 = vmul.f32 %v291, %v792
        %v877 = vmul.f32 %v295, %v793
        %v878 = vsub.f32 %v862, %v870
        %v879 = vsub.f32 %v863, %v871
        %v880 = vsub.f32 %v864, %v872
        %v881 = vsub.f32 %v865, %v873
        %v882 = vsub.f32 %v866, %v874
        %v883 = vsub.f32 %v867, %v875
        %v884 = vsub.f32 %v868, %v876
        %v885 = vsub.f32 %v869, %v877
        %vm894 = vcmask 1045504
        %v895 = vrot.slane %v854, 2
        %v896 = vrot.slane %v858, 2
        %v897 = vsel %vm894, %v895, %v896
        %v898 = vrot.slane %v855, 2
        %v899 = vrot.slane %v859, 2
        %v900 = vsel %vm894, %v898, %v899
        %v901 = vrot.slane %v856, 2
        %v902 = vrot.slane %v860, 2
        %v903 = vsel %vm894, %v901, %v902
        %v904 = vrot.slane %v857, 2
        %v905 = vrot.slane %v861, 2
        %v906 = vsel %vm894, %v904, %v905
        %v919 = vsel %vm894, %v896, %v895
        %v920 = vsel %vm894, %v899, %v898
        %v921 = vsel %vm894, %v902, %v901
        %v922 = vsel %vm894, %v905, %v904
        %v923 = vrot.slane %v858, 6
        %v924 = vrot.slane %v859, 6
        %v925 = vrot.slane %v860, 6
        %v926 = vrot.slane %v861, 6
        %vm931 = vcmask 1041408
        %v932 = vrot.slane %v854, 6
        %v933 = vrot.slane %v855, 6
        %v934 = vrot.slane %v856, 6
        %v935 = vrot.slane %v857, 6
        %v936 = vsel %vm931, %v932, %v923
        %v937 = vsel %vm931, %v933, %v924
        %v938 = vsel %vm931, %v934, %v925
        %v939 = vsel %vm931, %v935, %v926
        %v948 = vsel %vm931, %v923, %v932
        %v949 = vsel %vm931, %v924, %v933
        %v950 = vsel %vm931, %v925, %v934
        %v951 = vsel %vm931, %v926, %v935
        %v952 = vsel %vm322, %v897, %v948
        %v953 = vsel %vm322, %v900, %v949
        %v954 = vsel %vm322, %v903, %v950
        %v955 = vsel %vm322, %v906, %v951
        %v956 = vsel %vm323, %v919, %v936
        %v957 = vsel %vm323, %v920, %v937
        %v958 = vsel %vm323, %v921, %v938
        %v959 = vsel %vm323, %v922, %v939
        %v968 = vrot.slane %v878, 2
        %v969 = vrot.slane %v882, 2
        %v970 = vsel %vm894, %v968, %v969
        %v971 = vrot.slane %v879, 2
        %v972 = vrot.slane %v883, 2
        %v973 = vsel %vm894, %v971, %v972
        %v974 = vrot.slane %v880, 2
        %v975 = vrot.slane %v884, 2
        %v976 = vsel %vm894, %v974, %v975
        %v977 = vrot.slane %v881, 2
        %v978 = vrot.slane %v885, 2
        %v979 = vsel %vm894, %v977, %v978
        %v992 = vsel %vm894, %v969, %v968
        %v993 = vsel %vm894, %v972, %v971
        %v994 = vsel %vm894, %v975, %v974
        %v995 = vsel %vm894, %v978, %v977
        %v996 = vrot.slane %v882, 6
        %v997 = vrot.slane %v883, 6
        %v998 = vrot.slane %v884, 6
        %v999 = vrot.slane %v885, 6
        %v1004 = vrot.slane %v878, 6
        %v1005 = vrot.slane %v879, 6
        %v1006 = vrot.slane %v880, 6
        %v1007 = vrot.slane %v881, 6
        %v1008 = vsel %vm931, %v1004, %v996
        %v1009 = vsel %vm931, %v1005, %v997
        %v1010 = vsel %vm931, %v1006, %v998
        %v1011 = vsel %vm931, %v1007, %v999
        %v1020 = vsel %vm931, %v996, %v1004
        %v1021 = vsel %vm931, %v997, %v1005
        %v1022 = vsel %vm931, %v998, %v1006
        %v1023 = vsel %vm931, %v999, %v1007
        %v1024 = vsel %vm322, %v970, %v1020
        %v1025 = vsel %vm322, %v973, %v1021
        %v1026 = vsel %vm322, %v976, %v1022
        %v1027 = vsel %vm322, %v979, %v1023
        %v1028 = vsel %vm323, %v992, %v1008
        %v1029 = vsel %vm323, %v993, %v1009
        %v1030 = vsel %vm323, %v994, %v1010
        %v1031 = vsel %vm323, %v995, %v1011
        %v1032 = vmul.f32 %v332, %v854
        %v1033 = vmul.f32 %v336, %v855
        %v1034 = vmul.f32 %v340, %v856
        %v1035 = vmul.f32 %v344, %v857
        %v1036 = vmul.f32 %v332, %v858
        %v1037 = vmul.f32 %v336, %v859
        %v1038 = vmul.f32 %v340, %v860
        %v1039 = vmul.f32 %v344, %v861
        %v1040 = vmul.f32 %v353, %v1024
        %v1041 = vmul.f32 %v357, %v1025
        %v1042 = vmul.f32 %v361, %v1026
        %v1043 = vmul.f32 %v365, %v1027
        %v1044 = vmul.f32 %v353, %v1028
        %v1045 = vmul.f32 %v357, %v1029
        %v1046 = vmul.f32 %v361, %v1030
        %v1047 = vmul.f32 %v365, %v1031
        %v1048 = vadd.f32 %v1032, %v1040
        %v1049 = vadd.f32 %v1033, %v1041
        %v1050 = vadd.f32 %v1034, %v1042
        %v1051 = vadd.f32 %v1035, %v1043
        %v1052 = vadd.f32 %v1036, %v1044
        %v1053 = vadd.f32 %v1037, %v1045
        %v1054 = vadd.f32 %v1038, %v1046
        %v1055 = vadd.f32 %v1039, %v1047
        %v1056 = vmul.f32 %v332, %v878
        %v1057 = vmul.f32 %v336, %v879
        %v1058 = vmul.f32 %v340, %v880
        %v1059 = vmul.f32 %v344, %v881
        %v1060 = vmul.f32 %v332, %v882
        %v1061 = vmul.f32 %v336, %v883
        %v1062 = vmul.f32 %v340, %v884
        %v1063 = vmul.f32 %v344, %v885
        %v1064 = vmul.f32 %v353, %v952
        %v1065 = vmul.f32 %v357, %v953
        %v1066 = vmul.f32 %v361, %v954
        %v1067 = vmul.f32 %v365, %v955
        %v1068 = vmul.f32 %v353, %v956
        %v1069 = vmul.f32 %v357, %v957
        %v1070 = vmul.f32 %v361, %v958
        %v1071 = vmul.f32 %v365, %v959
        %v1072 = vsub.f32 %v1056, %v1064
        %v1073 = vsub.f32 %v1057, %v1065
        %v1074 = vsub.f32 %v1058, %v1066
        %v1075 = vsub.f32 %v1059, %v1067
        %v1076 = vsub.f32 %v1060, %v1068
        %v1077 = vsub.f32 %v1061, %v1069
        %v1078 = vsub.f32 %v1062, %v1070
        %v1079 = vsub.f32 %v1063, %v1071
        %vm1088 = vcmask 1046528
        %v1089 = vrot.slane %v1048, 1
        %v1090 = vrot.slane %v1052, 1
        %v1091 = vsel %vm1088, %v1089, %v1090
        %v1092 = vrot.slane %v1049, 1
        %v1093 = vrot.slane %v1053, 1
        %v1094 = vsel %vm1088, %v1092, %v1093
        %v1095 = vrot.slane %v1050, 1
        %v1096 = vrot.slane %v1054, 1
        %v1097 = vsel %vm1088, %v1095, %v1096
        %v1098 = vrot.slane %v1051, 1
        %v1099 = vrot.slane %v1055, 1
        %v1100 = vsel %vm1088, %v1098, %v1099
        %v1113 = vsel %vm1088, %v1090, %v1089
        %v1114 = vsel %vm1088, %v1093, %v1092
        %v1115 = vsel %vm1088, %v1096, %v1095
        %v1116 = vsel %vm1088, %v1099, %v1098
        %v1117 = vrot.slane %v1052, 7
        %v1118 = vrot.slane %v1053, 7
        %v1119 = vrot.slane %v1054, 7
        %v1120 = vrot.slane %v1055, 7
        %vm1125 = vcmask 1040384
        %v1126 = vrot.slane %v1048, 7
        %v1127 = vrot.slane %v1049, 7
        %v1128 = vrot.slane %v1050, 7
        %v1129 = vrot.slane %v1051, 7
        %v1130 = vsel %vm1125, %v1126, %v1117
        %v1131 = vsel %vm1125, %v1127, %v1118
        %v1132 = vsel %vm1125, %v1128, %v1119
        %v1133 = vsel %vm1125, %v1129, %v1120
        %v1142 = vsel %vm1125, %v1117, %v1126
        %v1143 = vsel %vm1125, %v1118, %v1127
        %v1144 = vsel %vm1125, %v1119, %v1128
        %v1145 = vsel %vm1125, %v1120, %v1129
        %v1146 = vsel %vm390, %v1091, %v1142
        %v1147 = vsel %vm390, %v1094, %v1143
        %v1148 = vsel %vm390, %v1097, %v1144
        %v1149 = vsel %vm390, %v1100, %v1145
        %v1150 = vsel %vm391, %v1113, %v1130
        %v1151 = vsel %vm391, %v1114, %v1131
        %v1152 = vsel %vm391, %v1115, %v1132
        %v1153 = vsel %vm391, %v1116, %v1133
        %v1162 = vrot.slane %v1072, 1
        %v1163 = vrot.slane %v1076, 1
        %v1164 = vsel %vm1088, %v1162, %v1163
        %v1165 = vrot.slane %v1073, 1
        %v1166 = vrot.slane %v1077, 1
        %v1167 = vsel %vm1088, %v1165, %v1166
        %v1168 = vrot.slane %v1074, 1
        %v1169 = vrot.slane %v1078, 1
        %v1170 = vsel %vm1088, %v1168, %v1169
        %v1171 = vrot.slane %v1075, 1
        %v1172 = vrot.slane %v1079, 1
        %v1173 = vsel %vm1088, %v1171, %v1172
        %v1186 = vsel %vm1088, %v1163, %v1162
        %v1187 = vsel %vm1088, %v1166, %v1165
        %v1188 = vsel %vm1088, %v1169, %v1168
        %v1189 = vsel %vm1088, %v1172, %v1171
        %v1190 = vrot.slane %v1076, 7
        %v1191 = vrot.slane %v1077, 7
        %v1192 = vrot.slane %v1078, 7
        %v1193 = vrot.slane %v1079, 7
        %v1198 = vrot.slane %v1072, 7
        %v1199 = vrot.slane %v1073, 7
        %v1200 = vrot.slane %v1074, 7
        %v1201 = vrot.slane %v1075, 7
        %v1202 = vsel %vm1125, %v1198, %v1190
        %v1203 = vsel %vm1125, %v1199, %v1191
        %v1204 = vsel %vm1125, %v1200, %v1192
        %v1205 = vsel %vm1125, %v1201, %v1193
        %v1214 = vsel %vm1125, %v1190, %v1198
        %v1215 = vsel %vm1125, %v1191, %v1199
        %v1216 = vsel %vm1125, %v1192, %v1200
        %v1217 = vsel %vm1125, %v1193, %v1201
        %v1218 = vsel %vm390, %v1164, %v1214
        %v1219 = vsel %vm390, %v1167, %v1215
        %v1220 = vsel %vm390, %v1170, %v1216
        %v1221 = vsel %vm390, %v1173, %v1217
        %v1222 = vsel %vm391, %v1186, %v1202
        %v1223 = vsel %vm391, %v1187, %v1203
        %v1224 = vsel %vm391, %v1188, %v1204
        %v1225 = vsel %vm391, %v1189, %v1205
        %v1226 = vmul.f32 %v400, %v1048
        %v1227 = vmul.f32 %v404, %v1049
        %v1228 = vmul.f32 %v408, %v1050
        %v1229 = vmul.f32 %v412, %v1051
        %v1230 = vmul.f32 %v400, %v1052
        %v1231 = vmul.f32 %v404, %v1053
        %v1232 = vmul.f32 %v408, %v1054
        %v1233 = vmul.f32 %v412, %v1055
        %v1234 = vmul.f32 %v421, %v1218
        %v1235 = vmul.f32 %v425, %v1219
        %v1236 = vmul.f32 %v429, %v1220
        %v1237 = vmul.f32 %v433, %v1221
        %v1238 = vmul.f32 %v421, %v1222
        %v1239 = vmul.f32 %v425, %v1223
        %v1240 = vmul.f32 %v429, %v1224
        %v1241 = vmul.f32 %v433, %v1225
        %v1242 = vadd.f32 %v1226, %v1234
        %v1243 = vadd.f32 %v1227, %v1235
        %v1244 = vadd.f32 %v1228, %v1236
        %v1245 = vadd.f32 %v1229, %v1237
        %v1246 = vadd.f32 %v1230, %v1238
        %v1247 = vadd.f32 %v1231, %v1239
        %v1248 = vadd.f32 %v1232, %v1240
        %v1249 = vadd.f32 %v1233, %v1241
        %v1250 = vmul.f32 %v400, %v1072
        %v1251 = vmul.f32 %v404, %v1073
        %v1252 = vmul.f32 %v408, %v1074
        %v1253 = vmul.f32 %v412, %v1075
        %v1254 = vmul.f32 %v400, %v1076
        %v1255 = vmul.f32 %v404, %v1077
        %v1256 = vmul.f32 %v408, %v1078
        %v1257 = vmul.f32 %v412, %v1079
        %v1258 = vmul.f32 %v421, %v1146
        %v1259 = vmul.f32 %v425, %v1147
        %v1260 = vmul.f32 %v429, %v1148
        %v1261 = vmul.f32 %v433, %v1149
        %v1262 = vmul.f32 %v421, %v1150
        %v1263 = vmul.f32 %v425, %v1151
        %v1264 = vmul.f32 %v429, %v1152
        %v1265 = vmul.f32 %v433, %v1153
        %v1266 = vsub.f32 %v1250, %v1258
        %v1267 = vsub.f32 %v1251, %v1259
        %v1268 = vsub.f32 %v1252, %v1260
        %v1269 = vsub.f32 %v1253, %v1261
        %v1270 = vsub.f32 %v1254, %v1262
        %v1271 = vsub.f32 %v1255, %v1263
        %v1272 = vsub.f32 %v1256, %v1264
        %v1273 = vsub.f32 %v1257, %v1265
        %s1274 = scalar_lea.vmem %s2, 32
        %v1275 = vld [vmem:[%s1274] sm:$0xff]
        %v1276 = vld [vmem:[%s1274 + $0x8] sm:$0xff]
        %v1277 = vld [vmem:[%s1274 + $0x10] sm:$0xff]
        %v1278 = vld [vmem:[%s1274 + $0x18] sm:$0xff]
        %v1280 = vsel %vm510, %v1275, 0
        %v1283 = vsel %vm510, %v1276, 0
        %v1286 = vsel %vm510, %v1277, 0
        %v1289 = vsel %vm510, %v1278, 0
        %1291 = vmatprep.subr.mxu0 %v1243
        %1292 = vmatpush1.msra.mxu0 %v1242
        %1293 = vmatprep.subr.mxu0 %v1247
        %1294 = vmatpush1.msra.mxu0 %v1246
        %1295 = vmatprep.subr.mxu0 %v1267
        %1296 = vmatpush1.msra.mxu0 %v1266
        %1297 = vmatprep.subr.mxu0 %v1271
        %1298 = vmatpush1.msra.mxu0 %v1270
        %1299 = vmatprep.subr.mxu0 0.0
        %1300 = vmatpush1.msra.mxu0 0.0
        %1301 = vmatprep.subr.mxu0 0.0
        %1302 = vmatpush1.msra.mxu0 0.0
        %1303 = vmatprep.subr.mxu0 0.0
        %1304 = vmatpush1.msra.mxu0 0.0
        %1305 = vmatprep.subr.mxu0 0.0
        %1306 = vmatpush1.msra.mxu0 0.0
        %1307 = vmatprep.subr.mxu0 0.0
        %1308 = vmatpush1.msra.mxu0 0.0
        %1309 = vmatprep.subr.mxu0 0.0
        %1310 = vmatpush1.msra.mxu0 0.0
        %1311 = vmatprep.subr.mxu0 0.0
        %1312 = vmatpush1.msra.mxu0 0.0
        %1313 = vmatprep.subr.mxu0 0.0
        %1314 = vmatpush1.msra.mxu0 0.0
        %1315 = vmatprep.subr.mxu0 0.0
        %1316 = vmatpush1.msra.mxu0 0.0
        %1317 = vmatprep.subr.mxu0 0.0
        %1318 = vmatpush1.msra.mxu0 0.0
        %1319 = vmatprep.subr.mxu0 0.0
        %1320 = vmatpush1.msra.mxu0 0.0
        %1321 = vmatprep.subr.mxu0 0.0
        %1322 = vmatpush1.msra.mxu0 0.0
        %1323 = vmatprep.subr.mxu0 0.0
        %1324 = vmatpush1.msra.mxu0 0.0
        %1325 = vmatprep.subr.mxu0 0.0
        %1326 = vmatpush1.msra.mxu0 0.0
        %1327 = vmatprep.subr.mxu0 0.0
        %1328 = vmatpush1.msra.mxu0 0.0
        %1329 = vmatprep.subr.mxu0 0.0
        %1330 = vmatpush1.msra.mxu0 0.0
        %1331 = vmatprep.subr.mxu0 0.0
        %1332 = vmatpush1.msra.mxu0 0.0
        %1333 = vmatprep.subr.mxu0 0.0
        %1334 = vmatpush1.msra.mxu0 0.0
        %1335 = vmatprep.subr.mxu0 0.0
        %1336 = vmatpush1.msra.mxu0 0.0
        %1337 = vmatprep.subr.mxu0 0.0
        %1338 = vmatpush1.msra.mxu0 0.0
        %1339 = vmatprep.subr.mxu0 0.0
        %1340 = vmatpush1.msra.mxu0 0.0
        %1341 = vmatprep.subr.mxu0 0.0
        %1342 = vmatpush1.msra.mxu0 0.0
        %1343 = vmatprep.subr.mxu0 0.0
        %1344 = vmatpush1.msra.mxu0 0.0
        %1345 = vmatprep.subr.mxu0 0.0
        %1346 = vmatpush1.msra.mxu0 0.0
        %1347 = vmatprep.subr.mxu0 0.0
        %1348 = vmatpush1.msra.mxu0 0.0
        %1349 = vmatprep.subr.mxu0 0.0
        %1350 = vmatpush1.msra.mxu0 0.0
        %1351 = vmatprep.subr.mxu0 0.0
        %1352 = vmatpush1.msra.mxu0 0.0
        %1353 = vmatprep.subr.mxu0 0.0
        %1354 = vmatpush1.msra.mxu0 0.0
        %1355 = vmatprep.mubr.f32.mxu0 0.0
        %1356 = vmatmul.mubr.f32.gmra.mrb[0].mxu0 %v1280
        %v1357 = vpop.f32.mrb[0].mxu0
        %v1358 = vadd.f32 0.0, %v1357
        %v1359 = vpop.f32.mrb[0].mxu0
        %v1360 = vadd.f32 0.0, %v1359
        %1361 = vmatprep.mubr.f32.mxu0 0.0
        %1362 = vmatmul.mubr.f32.gmra.mrb[0].mxu0 %v1283
        %v1363 = vpop.f32.mrb[0].mxu0
        %v1364 = vadd.f32 0.0, %v1363
        %v1365 = vpop.f32.mrb[0].mxu0
        %v1366 = vadd.f32 0.0, %v1365
        %1367 = vmatprep.mubr.f32.mxu0 0.0
        %1368 = vmatmul.mubr.f32.gmra.mrb[0].mxu0 %v1286
        %v1369 = vpop.f32.mrb[0].mxu0
        %v1370 = vadd.f32 0.0, %v1369
        %v1371 = vpop.f32.mrb[0].mxu0
        %v1372 = vadd.f32 0.0, %v1371
        %1373 = vmatprep.mubr.f32.mxu0 0.0
        %1374 = vmatmul.mubr.f32.gmra.mrb[0].mxu0 %v1289
        %v1375 = vpop.f32.mrb[0].mxu0
        %v1376 = vadd.f32 0.0, %v1375
        %v1377 = vpop.f32.mrb[0].mxu0
        %v1378 = vadd.f32 0.0, %v1377
        %1379 = vdwg.mxu0
        %1380 = vmatprep.subr.mxu0 %v1245
        %1381 = vmatpush1.msra.mxu0 %v1244
        %1382 = vmatprep.subr.mxu0 %v1249
        %1383 = vmatpush1.msra.mxu0 %v1248
        %1384 = vmatprep.subr.mxu0 %v1269
        %1385 = vmatpush1.msra.mxu0 %v1268
        %1386 = vmatprep.subr.mxu0 %v1273
        %1387 = vmatpush1.msra.mxu0 %v1272
        %1388 = vmatprep.subr.mxu0 0.0
        %1389 = vmatpush1.msra.mxu0 0.0
        %1390 = vmatprep.subr.mxu0 0.0
        %1391 = vmatpush1.msra.mxu0 0.0
        %1392 = vmatprep.subr.mxu0 0.0
        %1393 = vmatpush1.msra.mxu0 0.0
        %1394 = vmatprep.subr.mxu0 0.0
        %1395 = vmatpush1.msra.mxu0 0.0
        %1396 = vmatprep.subr.mxu0 0.0
        %1397 = vmatpush1.msra.mxu0 0.0
        %1398 = vmatprep.subr.mxu0 0.0
        %1399 = vmatpush1.msra.mxu0 0.0
        %1400 = vmatprep.subr.mxu0 0.0
        %1401 = vmatpush1.msra.mxu0 0.0
        %1402 = vmatprep.subr.mxu0 0.0
        %1403 = vmatpush1.msra.mxu0 0.0
        %1404 = vmatprep.subr.mxu0 0.0
        %1405 = vmatpush1.msra.mxu0 0.0
        %1406 = vmatprep.subr.mxu0 0.0
        %1407 = vmatpush1.msra.mxu0 0.0
        %1408 = vmatprep.subr.mxu0 0.0
        %1409 = vmatpush1.msra.mxu0 0.0
        %1410 = vmatprep.subr.mxu0 0.0
        %1411 = vmatpush1.msra.mxu0 0.0
        %1412 = vmatprep.subr.mxu0 0.0
        %1413 = vmatpush1.msra.mxu0 0.0
        %1414 = vmatprep.subr.mxu0 0.0
        %1415 = vmatpush1.msra.mxu0 0.0
        %1416 = vmatprep.subr.mxu0 0.0
        %1417 = vmatpush1.msra.mxu0 0.0
        %1418 = vmatprep.subr.mxu0 0.0
        %1419 = vmatpush1.msra.mxu0 0.0
        %1420 = vmatprep.subr.mxu0 0.0
        %1421 = vmatpush1.msra.mxu0 0.0
        %1422 = vmatprep.subr.mxu0 0.0
        %1423 = vmatpush1.msra.mxu0 0.0
        %1424 = vmatprep.subr.mxu0 0.0
        %1425 = vmatpush1.msra.mxu0 0.0
        %1426 = vmatprep.subr.mxu0 0.0
        %1427 = vmatpush1.msra.mxu0 0.0
        %1428 = vmatprep.subr.mxu0 0.0
        %1429 = vmatpush1.msra.mxu0 0.0
        %1430 = vmatprep.subr.mxu0 0.0
        %1431 = vmatpush1.msra.mxu0 0.0
        %1432 = vmatprep.subr.mxu0 0.0
        %1433 = vmatpush1.msra.mxu0 0.0
        %1434 = vmatprep.subr.mxu0 0.0
        %1435 = vmatpush1.msra.mxu0 0.0
        %1436 = vmatprep.subr.mxu0 0.0
        %1437 = vmatpush1.msra.mxu0 0.0
        %1438 = vmatprep.subr.mxu0 0.0
        %1439 = vmatpush1.msra.mxu0 0.0
        %1440 = vmatprep.subr.mxu0 0.0
        %1441 = vmatpush1.msra.mxu0 0.0
        %1442 = vmatprep.subr.mxu0 0.0
        %1443 = vmatpush1.msra.mxu0 0.0
        %1444 = vmatprep.mubr.f32.mxu0 0.0
        %1445 = vmatmul.mubr.f32.gmra.mrb[0].mxu0 %v1280
        %v1446 = vpop.f32.mrb[0].mxu0
        %v1447 = vadd.f32 0.0, %v1446
        %v1448 = vpop.f32.mrb[0].mxu0
        %v1449 = vadd.f32 0.0, %v1448
        %1450 = vmatprep.mubr.f32.mxu0 0.0
        %1451 = vmatmul.mubr.f32.gmra.mrb[0].mxu0 %v1283
        %v1452 = vpop.f32.mrb[0].mxu0
        %v1453 = vadd.f32 0.0, %v1452
        %v1454 = vpop.f32.mrb[0].mxu0
        %v1455 = vadd.f32 0.0, %v1454
        %1456 = vmatprep.mubr.f32.mxu0 0.0
        %1457 = vmatmul.mubr.f32.gmra.mrb[0].mxu0 %v1286
        %v1458 = vpop.f32.mrb[0].mxu0
        %v1459 = vadd.f32 0.0, %v1458
        %v1460 = vpop.f32.mrb[0].mxu0
        %v1461 = vadd.f32 0.0, %v1460
        %1462 = vmatprep.mubr.f32.mxu0 0.0
        %1463 = vmatmul.mubr.f32.gmra.mrb[0].mxu0 %v1289
        %v1464 = vpop.f32.mrb[0].mxu0
        %v1465 = vadd.f32 0.0, %v1464
        %v1466 = vpop.f32.mrb[0].mxu0
        %v1467 = vadd.f32 0.0, %v1466
        %1468 = vdwg.mxu0
        %v1469 = vmul.f32 %v1358, %v1358
        %v1470 = vmul.f32 %v1360, %v1360
        %v1471 = vmul.f32 %v1447, %v1447
        %v1472 = vmul.f32 %v1449, %v1449
        %v1473 = vmul.f32 %v1370, %v1370
        %v1474 = vmul.f32 %v1372, %v1372
        %v1475 = vmul.f32 %v1459, %v1459
        %v1476 = vmul.f32 %v1461, %v1461
        %v1477 = vadd.f32 %v1469, %v1473
        %v1478 = vadd.f32 %v1470, %v1474
        %v1479 = vadd.f32 %v1471, %v1475
        %v1480 = vadd.f32 %v1472, %v1476
        %v1481 = vmul.f32 %v1364, %v1364
        %v1482 = vmul.f32 %v1366, %v1366
        %v1483 = vmul.f32 %v1453, %v1453
        %v1484 = vmul.f32 %v1455, %v1455
        %v1485 = vmul.f32 %v1376, %v1376
        %v1486 = vmul.f32 %v1378, %v1378
        %v1487 = vmul.f32 %v1465, %v1465
        %v1488 = vmul.f32 %v1467, %v1467
        %v1489 = vadd.f32 %v1481, %v1485
        %v1490 = vadd.f32 %v1482, %v1486
        %v1491 = vadd.f32 %v1483, %v1487
        %v1492 = vadd.f32 %v1484, %v1488
        %v1493 = vsub.f32 %v1477, %v1489
        %v1494 = vsub.f32 %v1478, %v1490
        %v1495 = vsub.f32 %v1479, %v1491
        %v1496 = vsub.f32 %v1480, %v1492
        %v1497 = vrot.slane %v1493, 4
        %v1498 = vadd.f32 %v1493, %v1497
        %v1499 = vrot.slane %v1498, 2
        %v1500 = vadd.f32 %v1498, %v1499
        %v1501 = vrot.slane %v1500, 1
        %v1502 = vadd.f32 %v1500, %v1501
        %v1503 = vrot.slane %v1494, 4
        %v1504 = vadd.f32 %v1494, %v1503
        %v1505 = vrot.slane %v1504, 2
        %v1506 = vadd.f32 %v1504, %v1505
        %v1507 = vrot.slane %v1506, 1
        %v1508 = vadd.f32 %v1506, %v1507
        %v1509 = vrot.slane %v1495, 4
        %v1510 = vadd.f32 %v1495, %v1509
        %v1511 = vrot.slane %v1510, 2
        %v1512 = vadd.f32 %v1510, %v1511
        %v1513 = vrot.slane %v1512, 1
        %v1514 = vadd.f32 %v1512, %v1513
        %v1515 = vrot.slane %v1496, 4
        %v1516 = vadd.f32 %v1496, %v1515
        %v1517 = vrot.slane %v1516, 2
        %v1518 = vadd.f32 %v1516, %v1517
        %v1519 = vrot.slane %v1518, 1
        %v1520 = vadd.f32 %v1518, %v1519
        %s1521 = sld [smem:[#allocation2]]
        %v1522 = vstv %s1521
        %v1523 = vadd.f32 %v1502, %v1522
        %v1524 = vadd.f32 %v1508, %v1522
        %v1525 = vadd.f32 %v1514, %v1522
        %v1526 = vadd.f32 %v1520, %v1522
        %s1527 = sld [smem:[#allocation2 + $0x1]]
        %v1528 = vstv %s1527
        %v1529 = vmul.f32 %v1523, %v1528
        %v1530 = vmul.f32 %v1524, %v1528
        %v1531 = vmul.f32 %v1525, %v1528
        %v1532 = vmul.f32 %v1526, %v1528
        %v1537 = vcombine.low %v1529, %v1530
        %v1538 = vcombine.low %v1531, %v1532
        %v1540 = vunpack.c.l.s4 1966171168
        %v1541 = vunpack.c.0.s8 %v1540
        %v1542 = vlaneseq
        %v1543 = vshrl.u32 %v1542, 7
        %v1544 = vsub.s32 %v1541, %v1543
        %v1545 = vrot.slane %v1537, %v1544
        %v1547 = vunpack.c.l.s4 1966171168
        %v1548 = vunpack.c.0.s8 %v1547
        %v1549 = vlaneseq
        %v1550 = vshrl.u32 %v1549, 7
        %v1551 = vsub.s32 %v1548, %v1550
        %v1552 = vrot.slane %v1538, %v1551
        %v1553 = vcombine.low %v1545, %v1552
        %v1555 = vunpack.c.l.s4 1966171168
        %v1556 = vunpack.c.0.s8 %v1555
        %v1557 = vlaneseq
        %v1558 = vshrl.u32 %v1557, 7
        %v1559 = vsub.s32 %v1556, %v1558
        %v1560 = vrot.slane %v1553, %v1559
        %v1562 = vlaneseq
        %vm1563 = vcmp.ge.s32.totalorder %v1562, 0
        %vm1564 = vcmp.lt.s32.totalorder %v1562, 512
        %vm1565 = vmand %vm1563, %vm1564
        %1566 = vst.msk [vmem:[%s178] sm:$0xf] %vm1565, %v1560
        %s1567 = sand.u32 %s94, 1
        %s1568 = scalar_lea.sflag [#allocation3], %s1567
        %s1569 = sand.u32 %s94, 1
        %s1570 = smul.addr %s1569, 4
        %s1571 = scalar_lea.vmem [#allocation5], %s1570
        // Predicated region
        $region37: #{bvqc_forward.1} parent=31 // pred_check
          %p1572 = pneg %p104
        $region38: #{bvqc_forward.1} parent=31 // pred_check_branch
          %1574 = sbr.rel (%p1572) target = $region40
        $region39: #{bvqc_forward.1} parent=31 // pred_region
          %s1575 = smul.u32 4, %s18
          %s1577 = ssub.s32 64, 64
          %1578 = vsyncadd %s1568, %s1577
          %s1579 = smul.addr %s1575, 16
          %s1580 = scalar_lea.hbm %s3, %s1579
          %s1582 = sshll.u32 %s1571, 4
          %s1583 = int_to_ptr.vmem [resolvable:$true] %s1582
          %1585 = dma.vmem_to_hbm [thread:$0]  %s1583, 64, %s1580, %s1568
        $region40: #{bvqc_forward.1} parent=31 // pred_fallthru
          _
      $region32: #{bvqc_forward.1} parent=5 // pred_fallthru
        _
      %p1586 = scmp.le.s32.totalorder 2, %s13
      // Predicated region
      $region41: #{bvqc_forward.1} parent=5 // pred_check
        %p1587 = pneg %p1586
      $region42: #{bvqc_forward.1} parent=5 // pred_check_branch
        %1589 = sbr.rel (%p1587) target = $region44
      $region43: #{bvqc_forward.1} parent=5 // pred_region
        %s1590 = ssub.s32 %s13, 2
        // Predicated region
        $region45: #{bvqc_forward.1} parent=43 // pred_check
          %p1591 = pneg %p110
        $region46: #{bvqc_forward.1} parent=43 // pred_check_branch
          %1593 = sbr.rel (%p1591) target = $region48
        $region47: #{bvqc_forward.1} parent=43 // pred_region
          %s1594 = sand.u32 %s95, 1
          %s1595 = scalar_lea.sflag [#allocation3], %s1594
          %s1596 = sand.u32 %s95, 1
          %s1597 = smul.addr %s1596, 4
          %s1598 = scalar_lea.vmem [#allocation5], %s1597
          %1599 = dma.done %s1595, 64
        $region48: #{bvqc_forward.1} parent=43 // pred_fallthru
          _
      $region44: #{bvqc_forward.1} parent=5 // pred_fallthru
        _
    $region6: #{bvqc_forward.1} parent=1 // loop_footer
      %s17 = sadd.s32 1, %s13
    $region7: #{bvqc_forward.1} parent=1 // loop_footer_branch
      %12 = sbr.rel target = $region3
    $region8: #{bvqc_forward.1} parent=1 // loop_exit
      _
    %1600 = vsyncpa [#allocation3], 1
    %s1601 = scalar_lea.sflag [#allocation3], 1
    %1602 = vsyncpa %s1601, 1
    %1603 = vsyncpa [#allocation4], 1
    %s1604 = scalar_lea.sflag [#allocation4], 1
    %1605 = vsyncpa %s1604, 1

</llo_original>
